<compile_context>
chip_gen: v5e
topology: v5e:2x2
jax: 0.10.0
libtpu: 0.0.40
codegen_flags: <defaults>
</compile_context>

<pallas_src>
from functools import partial

import jax
import jax.numpy as jnp
from jax import lax
from jax.experimental import pallas as pl
from jax.experimental.pallas import tpu as pltpu


def _lstm_kernel(x_ref, wih_ref, whh_ref, b_ref, fcw_ref, fcb_ref,
                 out_ref, gx_scr, *, b_pad, seq_len, hdim, inp):
    H = hdim

    # ---- Hoisted input projection for all T timesteps.
    #      K = INP = 4, so 4 VPU broadcast-FMAs beat a lane-sparse MXU dot and
    #      keep the MXU free for the recurrent matmul.
    gx = x_ref[:, 0:1] * wih_ref[0:1, :] + b_ref[...]
    for k in range(1, inp):
        gx = gx + x_ref[:, k:k + 1] * wih_ref[k:k + 1, :]
    gx_scr[...] = gx

    def step(t, carry):
        h, c = carry
        row0 = pl.multiple_of(t * b_pad, 8)          # 8-sublane-aligned slice
        g_x = gx_scr[pl.ds(row0, b_pad), :]          # (B_pad, 4H), f32

        # Single-pass bf16 MXU matmul, f32 accumulation.  whh_ref is indexed
        # inside the dot (not hoisted) so the 128x512 weight streams from VMEM
        # without occupying the vreg file across the unrolled loop.
        gates = g_x + jnp.dot(h.astype(jnp.bfloat16), whh_ref[...],
                              preferred_element_type=jnp.float32)

        # sigmoid(x) = 0.5 * (tanh(0.5 x) + 1): one EUP pass per gate.
        i_g = 0.5 * (jnp.tanh(0.5 * gates[:, 0 * H:1 * H]) + 1.0)
        f_g = 0.5 * (jnp.tanh(0.5 * gates[:, 1 * H:2 * H]) + 1.0)
        g_g = jnp.tanh(gates[:, 2 * H:3 * H])
        o_g = 0.5 * (jnp.tanh(0.5 * gates[:, 3 * H:4 * H]) + 1.0)

        c_new = f_g * c + i_g * g_g
        h_new = o_g * jnp.tanh(c_new)
        return h_new, c_new

    h0 = jnp.zeros((b_pad, H), jnp.float32)
    c0 = jnp.zeros((b_pad, H), jnp.float32)
    # Fully unrolled recurrence (T=8): gives the LLO scheduler the whole chain.
    # TODO(synk): switch to bounded unroll (e.g. 8) if T grows into the hundreds.
    h_last, _ = lax.fori_loop(0, seq_len, step, (h0, c0), unroll=True)

    # ---- Final Linear(H -> 1): VPU multiply + lane reduction (single output
    #      column; not worth an MXU push/drain).  The 1-lane store is a single
    #      masked vst, negligible at this size.
    out_ref[...] = (jnp.sum(h_last * fcw_ref[...], axis=-1, keepdims=True)
                    + fcb_ref[...])


def prepare_params(w_ih, w_hh, b_ih, b_hh, fc_w, fc_b):
    """One-time weight relayout (do NOT run per call).

    PyTorch shapes: w_ih (4H, INP), w_hh (4H, H), b_ih/b_hh (4H,),
                    fc_w (1, H), fc_b (1,).
    """
    H = w_hh.shape[1]
    return {
        "wih_t": jnp.transpose(w_ih).astype(jnp.float32),            # (INP, 4H)
        "whh_t": jnp.transpose(w_hh).astype(jnp.bfloat16),           # (H, 4H) bf16 MXU operand
        "bias": (b_ih + b_hh).reshape(1, 4 * H).astype(jnp.float32),  # (1, 4H)
        "fcw": fc_w.reshape(1, H).astype(jnp.float32),                # (1, H)
        "fcb": fc_b.reshape(1, 1).astype(jnp.float32),                # (1, 1)
    }


@jax.jit
def lstm_d_forward(x_btf, params):
    """x_btf: (B, T, INP) float32 (batch_first, like the PyTorch module).
    Returns: (B, 1) float32."""
    B, T, INP = x_btf.shape
    H = params["fcw"].shape[1]
    B_pad = ((B + 7) // 8) * 8  # round batch up to the 8-sublane granularity

    x = x_btf.astype(jnp.float32)
    if B_pad != B:
        x = jnp.pad(x, ((0, B_pad - B), (0, 0), (0, 0)))
    # Time-major, flattened: row t*B_pad + b holds x[b, t, :] (tiny array; this
    # relayout fuses into the same jitted executable as the pallas_call).
    x_tb = jnp.transpose(x, (1, 0, 2)).reshape(T * B_pad, INP)

    kernel = partial(_lstm_kernel, b_pad=B_pad, seq_len=T, hdim=H, inp=INP)

    out_pad = pl.pallas_call(
        kernel,
        out_shape=jax.ShapeDtypeStruct((B_pad, 1), jnp.float32),
        # No grid: every operand fits trivially in VMEM (full-array specs);
        # the recurrence loops inside the body.
        scratch_shapes=[
            pltpu.VMEM((T * B_pad, 4 * H), jnp.float32),  # hoisted x-projection
        ],
    )(x_tb, params["wih_t"], params["whh_t"], params["bias"],
      params["fcw"], params["fcb"])

    return out_pad[:B]


def _reference_forward(x_btf, w_ih, w_hh, b_ih, b_hh, fc_w, fc_b):
    """Pure-JAX f32 reference matching PyTorch nn.LSTM + nn.Linear semantics."""
    B, T, INP = x_btf.shape
    H = w_hh.shape[1]
    wih_t = jnp.transpose(w_ih)
    whh_t = jnp.transpose(w_hh)
    bias = b_ih + b_hh

    def step(carry, x_t):
        h, c = carry
        gates = x_t @ wih_t + h @ whh_t + bias
        i = jax.nn.sigmoid(gates[:, 0 * H:1 * H])
        f = jax.nn.sigmoid(gates[:, 1 * H:2 * H])
        g = jnp.tanh(gates[:, 2 * H:3 * H])
        o = jax.nn.sigmoid(gates[:, 3 * H:4 * H])
        c_new = f * c + i * g
        h_new = o * jnp.tanh(c_new)
        return (h_new, c_new), None

    h0 = jnp.zeros((B, H), jnp.float32)
    c0 = jnp.zeros((B, H), jnp.float32)
    (h_last, _), _ = lax.scan(step, (h0, c0), jnp.transpose(x_btf, (1, 0, 2)))
    return h_last @ jnp.transpose(fc_w) + fc_b


if __name__ == "__main__":
    # Small shapes consistent with the module defaults: inp=4, hdim=128,
    # batch=2, seq=8.
    B, T, INP, H = 2, 8, 4, 128

    key = jax.random.PRNGKey(0)
    ks = jax.random.split(key, 7)
    bound = 1.0 / jnp.sqrt(jnp.float32(H))  # PyTorch default uniform init range

    x = jax.random.normal(ks[0], (B, T, INP), dtype=jnp.float32)
    w_ih = jax.random.uniform(ks[1], (4 * H, INP), jnp.float32, -bound, bound)
    w_hh = jax.random.uniform(ks[2], (4 * H, H), jnp.float32, -bound, bound)
    b_ih = jax.random.uniform(ks[3], (4 * H,), jnp.float32, -bound, bound)
    b_hh = jax.random.uniform(ks[4], (4 * H,), jnp.float32, -bound, bound)
    fc_w = jax.random.uniform(ks[5], (1, H), jnp.float32, -bound, bound)
    fc_b = jax.random.uniform(ks[6], (1,), jnp.float32, -bound, bound)

    params = prepare_params(w_ih, w_hh, b_ih, b_hh, fc_w, fc_b)  # one-time prep

    out = lstm_d_forward(x, params)
    out = jax.block_until_ready(out)

    ref = _reference_forward(x, w_ih, w_hh, b_ih, b_hh, fc_w, fc_b)
    assert out.shape == (B, 1), out.shape
    # Tolerance loosened vs the f32 reference: the recurrent matmul now uses
    # bf16 MXU operands (f32 accumulation) — a deliberate precision trade.
    assert jnp.allclose(out, ref, rtol=5e-2, atol=5e-2), (out, ref)

    print("KERNEL_OK")
</pallas_src>

<mosaic_0001>
module attributes {stable_mosaic.version = 11 : i64} {
  func.func @_lstm_kernel(%arg0: memref<64x4xf32, #tpu.memory_space<vmem>>, %arg1: memref<4x512xf32, #tpu.memory_space<vmem>>, %arg2: memref<128x512xbf16, #tpu.memory_space<vmem>>, %arg3: memref<1x512xf32, #tpu.memory_space<vmem>>, %arg4: memref<1x128xf32, #tpu.memory_space<vmem>>, %arg5: memref<1x1xf32, #tpu.memory_space<vmem>>, %arg6: memref<8x1xf32, #tpu.memory_space<vmem>>, %arg7: memref<64x512xf32, #tpu.memory_space<vmem>>) attributes {dimension_semantics = [], scalar_prefetch = 0 : i64, scratch_operands = 1 : i64, tpu.core_type = #tpu.core_type<tc>} {
    %c0 = arith.constant 0 : index
    %c0_0 = arith.constant 0 : index
    %0 = vector.load %arg0[%c0, %c0_0] : memref<64x4xf32, #tpu.memory_space<vmem>>, vector<64x1xf32>
    %c0_1 = arith.constant 0 : index
    %c0_2 = arith.constant 0 : index
    %1 = vector.load %arg1[%c0_1, %c0_2] : memref<4x512xf32, #tpu.memory_space<vmem>>, vector<1x512xf32>
    %2 = vector.broadcast %0 : vector<64x1xf32> to vector<64x512xf32>
    %3 = vector.broadcast %1 : vector<1x512xf32> to vector<64x512xf32>
    %4 = arith.mulf %2, %3 : vector<64x512xf32>
    %c0_3 = arith.constant 0 : index
    %c0_4 = arith.constant 0 : index
    %5 = vector.load %arg3[%c0_3, %c0_4] : memref<1x512xf32, #tpu.memory_space<vmem>>, vector<1x512xf32>
    %6 = vector.broadcast %5 : vector<1x512xf32> to vector<64x512xf32>
    %7 = arith.addf %4, %6 : vector<64x512xf32>
    %c0_5 = arith.constant 0 : index
    %c1 = arith.constant 1 : index
    %8 = vector.load %arg0[%c0_5, %c1] : memref<64x4xf32, #tpu.memory_space<vmem>>, vector<64x1xf32>
    %c1_6 = arith.constant 1 : index
    %c0_7 = arith.constant 0 : index
    %9 = vector.load %arg1[%c1_6, %c0_7] : memref<4x512xf32, #tpu.memory_space<vmem>>, vector<1x512xf32>
    %10 = vector.broadcast %8 : vector<64x1xf32> to vector<64x512xf32>
    %11 = vector.broadcast %9 : vector<1x512xf32> to vector<64x512xf32>
    %12 = arith.mulf %10, %11 : vector<64x512xf32>
    %13 = arith.addf %7, %12 : vector<64x512xf32>
    %c0_8 = arith.constant 0 : index
    %c2 = arith.constant 2 : index
    %14 = vector.load %arg0[%c0_8, %c2] : memref<64x4xf32, #tpu.memory_space<vmem>>, vector<64x1xf32>
    %c2_9 = arith.constant 2 : index
    %c0_10 = arith.constant 0 : index
    %15 = vector.load %arg1[%c2_9, %c0_10] : memref<4x512xf32, #tpu.memory_space<vmem>>, vector<1x512xf32>
    %16 = vector.broadcast %14 : vector<64x1xf32> to vector<64x512xf32>
    %17 = vector.broadcast %15 : vector<1x512xf32> to vector<64x512xf32>
    %18 = arith.mulf %16, %17 : vector<64x512xf32>
    %19 = arith.addf %13, %18 : vector<64x512xf32>
    %c0_11 = arith.constant 0 : index
    %c3 = arith.constant 3 : index
    %20 = vector.load %arg0[%c0_11, %c3] : memref<64x4xf32, #tpu.memory_space<vmem>>, vector<64x1xf32>
    %c3_12 = arith.constant 3 : index
    %c0_13 = arith.constant 0 : index
    %21 = vector.load %arg1[%c3_12, %c0_13] : memref<4x512xf32, #tpu.memory_space<vmem>>, vector<1x512xf32>
    %22 = vector.broadcast %20 : vector<64x1xf32> to vector<64x512xf32>
    %23 = vector.broadcast %21 : vector<1x512xf32> to vector<64x512xf32>
    %24 = arith.mulf %22, %23 : vector<64x512xf32>
    %25 = arith.addf %19, %24 : vector<64x512xf32>
    %c0_14 = arith.constant 0 : index
    %c0_15 = arith.constant 0 : index
    %26 = vector.load %arg7[%c0_14, %c0_15] : memref<64x512xf32, #tpu.memory_space<vmem>>, vector<64x512xf32>
    tpu.vector_store %arg7[%c0_14, %c0_15], %25 {strides = array<i32>} : memref<64x512xf32, #tpu.memory_space<vmem>>, vector<64x512xf32>,
    %cst = arith.constant 0.000000e+00 : f32
    %27 = vector.broadcast %cst : f32 to vector<8x128xf32>
    %cst_16 = arith.constant 0.000000e+00 : f32
    %28 = vector.broadcast %cst_16 : f32 to vector<8x128xf32>
    %c0_i32 = arith.constant 0 : i32
    %c8_i32 = arith.constant 8 : i32
    %29 = arith.muli %c0_i32, %c8_i32 : i32
    %30 = tpu.assume_multiple %29, 8 : i32
    %31 = arith.index_cast %30 : i32 to index
    %c0_17 = arith.constant 0 : index
    %32 = vector.load %arg7[%31, %c0_17] : memref<64x512xf32, #tpu.memory_space<vmem>>, vector<8x512xf32>
    %33 = arith.truncf %27 : vector<8x128xf32> to vector<8x128xbf16>
    %c0_18 = arith.constant 0 : index
    %c0_19 = arith.constant 0 : index
    %34 = vector.load %arg2[%c0_18, %c0_19] : memref<128x512xbf16, #tpu.memory_space<vmem>>, vector<128x512xbf16>
    %cst_20 = arith.constant dense<0.000000e+00> : vector<8x512xf32>
    %35 = tpu.matmul %33, %34, %cst_20 {dimension_numbers = #tpu.dot_dimension_numbers<[1], [0], [0], [1], [0, 0, 1, 1], [], []>} : vector<8x128xbf16>, vector<128x512xbf16>, vector<8x512xf32> -> vector<8x512xf32>
    %36 = arith.addf %32, %35 : vector<8x512xf32>
    %37 = vector.extract_strided_slice %36 {offsets = [0, 0], sizes = [8, 128], strides = [1, 1]} : vector<8x512xf32> to vector<8x128xf32>
    %cst_21 = arith.constant 5.000000e-01 : f32
    %38 = vector.broadcast %cst_21 : f32 to vector<8x128xf32>
    %39 = arith.mulf %38, %37 : vector<8x128xf32>
    %40 = math.tanh %39 : vector<8x128xf32>
    %cst_22 = arith.constant 1.000000e+00 : f32
    %41 = vector.broadcast %cst_22 : f32 to vector<8x128xf32>
    %42 = arith.addf %40, %41 : vector<8x128xf32>
    %cst_23 = arith.constant 5.000000e-01 : f32
    %43 = vector.broadcast %cst_23 : f32 to vector<8x128xf32>
    %44 = arith.mulf %43, %42 : vector<8x128xf32>
    %45 = vector.extract_strided_slice %36 {offsets = [0, 128], sizes = [8, 128], strides = [1, 1]} : vector<8x512xf32> to vector<8x128xf32>
    %cst_24 = arith.constant 5.000000e-01 : f32
    %46 = vector.broadcast %cst_24 : f32 to vector<8x128xf32>
    %47 = arith.mulf %46, %45 : vector<8x128xf32>
    %48 = math.tanh %47 : vector<8x128xf32>
    %cst_25 = arith.constant 1.000000e+00 : f32
    %49 = vector.broadcast %cst_25 : f32 to vector<8x128xf32>
    %50 = arith.addf %48, %49 : vector<8x128xf32>
    %cst_26 = arith.constant 5.000000e-01 : f32
    %51 = vector.broadcast %cst_26 : f32 to vector<8x128xf32>
    %52 = arith.mulf %51, %50 : vector<8x128xf32>
    %53 = vector.extract_strided_slice %36 {offsets = [0, 256], sizes = [8, 128], strides = [1, 1]} : vector<8x512xf32> to vector<8x128xf32>
    %54 = math.tanh %53 : vector<8x128xf32>
    %55 = vector.extract_strided_slice %36 {offsets = [0, 384], sizes = [8, 128], strides = [1, 1]} : vector<8x512xf32> to vector<8x128xf32>
    %cst_27 = arith.constant 5.000000e-01 : f32
    %56 = vector.broadcast %cst_27 : f32 to vector<8x128xf32>
    %57 = arith.mulf %56, %55 : vector<8x128xf32>
    %58 = math.tanh %57 : vector<8x128xf32>
    %cst_28 = arith.constant 1.000000e+00 : f32
    %59 = vector.broadcast %cst_28 : f32 to vector<8x128xf32>
    %60 = arith.addf %58, %59 : vector<8x128xf32>
    %cst_29 = arith.constant 5.000000e-01 : f32
    %61 = vector.broadcast %cst_29 : f32 to vector<8x128xf32>
    %62 = arith.mulf %61, %60 : vector<8x128xf32>
    %63 = arith.mulf %52, %28 : vector<8x128xf32>
    %64 = arith.mulf %44, %54 : vector<8x128xf32>
    %65 = arith.addf %63, %64 : vector<8x128xf32>
    %66 = math.tanh %65 : vector<8x128xf32>
    %67 = arith.mulf %62, %66 : vector<8x128xf32>
    %c1_i32 = arith.constant 1 : i32
    %c8_i32_30 = arith.constant 8 : i32
    %68 = arith.muli %c1_i32, %c8_i32_30 : i32
    %69 = tpu.assume_multiple %68, 8 : i32
    %70 = arith.index_cast %69 : i32 to index
    %c0_31 = arith.constant 0 : index
    %71 = vector.load %arg7[%70, %c0_31] : memref<64x512xf32, #tpu.memory_space<vmem>>, vector<8x512xf32>
    %72 = arith.truncf %67 : vector<8x128xf32> to vector<8x128xbf16>
    %c0_32 = arith.constant 0 : index
    %c0_33 = arith.constant 0 : index
    %73 = vector.load %arg2[%c0_32, %c0_33] : memref<128x512xbf16, #tpu.memory_space<vmem>>, vector<128x512xbf16>
    %cst_34 = arith.constant dense<0.000000e+00> : vector<8x512xf32>
    %74 = tpu.matmul %72, %73, %cst_34 {dimension_numbers = #tpu.dot_dimension_numbers<[1], [0], [0], [1], [0, 0, 1, 1], [], []>} : vector<8x128xbf16>, vector<128x512xbf16>, vector<8x512xf32> -> vector<8x512xf32>
    %75 = arith.addf %71, %74 : vector<8x512xf32>
    %76 = vector.extract_strided_slice %75 {offsets = [0, 0], sizes = [8, 128], strides = [1, 1]} : vector<8x512xf32> to vector<8x128xf32>
    %cst_35 = arith.constant 5.000000e-01 : f32
    %77 = vector.broadcast %cst_35 : f32 to vector<8x128xf32>
    %78 = arith.mulf %77, %76 : vector<8x128xf32>
    %79 = math.tanh %78 : vector<8x128xf32>
    %cst_36 = arith.constant 1.000000e+00 : f32
    %80 = vector.broadcast %cst_36 : f32 to vector<8x128xf32>
    %81 = arith.addf %79, %80 : vector<8x128xf32>
    %cst_37 = arith.constant 5.000000e-01 : f32
    %82 = vector.broadcast %cst_37 : f32 to vector<8x128xf32>
    %83 = arith.mulf %82, %81 : vector<8x128xf32>
    %84 = vector.extract_strided_slice %75 {offsets = [0, 128], sizes = [8, 128], strides = [1, 1]} : vector<8x512xf32> to vector<8x128xf32>
    %cst_38 = arith.constant 5.000000e-01 : f32
    %85 = vector.broadcast %cst_38 : f32 to vector<8x128xf32>
    %86 = arith.mulf %85, %84 : vector<8x128xf32>
    %87 = math.tanh %86 : vector<8x128xf32>
    %cst_39 = arith.constant 1.000000e+00 : f32
    %88 = vector.broadcast %cst_39 : f32 to vector<8x128xf32>
    %89 = arith.addf %87, %88 : vector<8x128xf32>
    %cst_40 = arith.constant 5.000000e-01 : f32
    %90 = vector.broadcast %cst_40 : f32 to vector<8x128xf32>
    %91 = arith.mulf %90, %89 : vector<8x128xf32>
    %92 = vector.extract_strided_slice %75 {offsets = [0, 256], sizes = [8, 128], strides = [1, 1]} : vector<8x512xf32> to vector<8x128xf32>
    %93 = math.tanh %92 : vector<8x128xf32>
    %94 = vector.extract_strided_slice %75 {offsets = [0, 384], sizes = [8, 128], strides = [1, 1]} : vector<8x512xf32> to vector<8x128xf32>
    %cst_41 = arith.constant 5.000000e-01 : f32
    %95 = vector.broadcast %cst_41 : f32 to vector<8x128xf32>
    %96 = arith.mulf %95, %94 : vector<8x128xf32>
    %97 = math.tanh %96 : vector<8x128xf32>
    %cst_42 = arith.constant 1.000000e+00 : f32
    %98 = vector.broadcast %cst_42 : f32 to vector<8x128xf32>
    %99 = arith.addf %97, %98 : vector<8x128xf32>
    %cst_43 = arith.constant 5.000000e-01 : f32
    %100 = vector.broadcast %cst_43 : f32 to vector<8x128xf32>
    %101 = arith.mulf %100, %99 : vector<8x128xf32>
    %102 = arith.mulf %91, %65 : vector<8x128xf32>
    %103 = arith.mulf %83, %93 : vector<8x128xf32>
    %104 = arith.addf %102, %103 : vector<8x128xf32>
    %105 = math.tanh %104 : vector<8x128xf32>
    %106 = arith.mulf %101, %105 : vector<8x128xf32>
    %c2_i32 = arith.constant 2 : i32
    %c8_i32_44 = arith.constant 8 : i32
    %107 = arith.muli %c2_i32, %c8_i32_44 : i32
    %108 = tpu.assume_multiple %107, 8 : i32
    %109 = arith.index_cast %108 : i32 to index
    %c0_45 = arith.constant 0 : index
    %110 = vector.load %arg7[%109, %c0_45] : memref<64x512xf32, #tpu.memory_space<vmem>>, vector<8x512xf32>
    %111 = arith.truncf %106 : vector<8x128xf32> to vector<8x128xbf16>
    %c0_46 = arith.constant 0 : index
    %c0_47 = arith.constant 0 : index
    %112 = vector.load %arg2[%c0_46, %c0_47] : memref<128x512xbf16, #tpu.memory_space<vmem>>, vector<128x512xbf16>
    %cst_48 = arith.constant dense<0.000000e+00> : vector<8x512xf32>
    %113 = tpu.matmul %111, %112, %cst_48 {dimension_numbers = #tpu.dot_dimension_numbers<[1], [0], [0], [1], [0, 0, 1, 1], [], []>} : vector<8x128xbf16>, vector<128x512xbf16>, vector<8x512xf32> -> vector<8x512xf32>
    %114 = arith.addf %110, %113 : vector<8x512xf32>
    %115 = vector.extract_strided_slice %114 {offsets = [0, 0], sizes = [8, 128], strides = [1, 1]} : vector<8x512xf32> to vector<8x128xf32>
    %cst_49 = arith.constant 5.000000e-01 : f32
    %116 = vector.broadcast %cst_49 : f32 to vector<8x128xf32>
    %117 = arith.mulf %116, %115 : vector<8x128xf32>
    %118 = math.tanh %117 : vector<8x128xf32>
    %cst_50 = arith.constant 1.000000e+00 : f32
    %119 = vector.broadcast %cst_50 : f32 to vector<8x128xf32>
    %120 = arith.addf %118, %119 : vector<8x128xf32>
    %cst_51 = arith.constant 5.000000e-01 : f32
    %121 = vector.broadcast %cst_51 : f32 to vector<8x128xf32>
    %122 = arith.mulf %121, %120 : vector<8x128xf32>
    %123 = vector.extract_strided_slice %114 {offsets = [0, 128], sizes = [8, 128], strides = [1, 1]} : vector<8x512xf32> to vector<8x128xf32>
    %cst_52 = arith.constant 5.000000e-01 : f32
    %124 = vector.broadcast %cst_52 : f32 to vector<8x128xf32>
    %125 = arith.mulf %124, %123 : vector<8x128xf32>
    %126 = math.tanh %125 : vector<8x128xf32>
    %cst_53 = arith.constant 1.000000e+00 : f32
    %127 = vector.broadcast %cst_53 : f32 to vector<8x128xf32>
    %128 = arith.addf %126, %127 : vector<8x128xf32>
    %cst_54 = arith.constant 5.000000e-01 : f32
    %129 = vector.broadcast %cst_54 : f32 to vector<8x128xf32>
    %130 = arith.mulf %129, %128 : vector<8x128xf32>
    %131 = vector.extract_strided_slice %114 {offsets = [0, 256], sizes = [8, 128], strides = [1, 1]} : vector<8x512xf32> to vector<8x128xf32>
    %132 = math.tanh %131 : vector<8x128xf32>
    %133 = vector.extract_strided_slice %114 {offsets = [0, 384], sizes = [8, 128], strides = [1, 1]} : vector<8x512xf32> to vector<8x128xf32>
    %cst_55 = arith.constant 5.000000e-01 : f32
    %134 = vector.broadcast %cst_55 : f32 to vector<8x128xf32>
    %135 = arith.mulf %134, %133 : vector<8x128xf32>
    %136 = math.tanh %135 : vector<8x128xf32>
    %cst_56 = arith.constant 1.000000e+00 : f32
    %137 = vector.broadcast %cst_56 : f32 to vector<8x128xf32>
    %138 = arith.addf %136, %137 : vector<8x128xf32>
    %cst_57 = arith.constant 5.000000e-01 : f32
    %139 = vector.broadcast %cst_57 : f32 to vector<8x128xf32>
    %140 = arith.mulf %139, %138 : vector<8x128xf32>
    %141 = arith.mulf %130, %104 : vector<8x128xf32>
    %142 = arith.mulf %122, %132 : vector<8x128xf32>
    %143 = arith.addf %141, %142 : vector<8x128xf32>
    %144 = math.tanh %143 : vector<8x128xf32>
    %145 = arith.mulf %140, %144 : vector<8x128xf32>
    %c3_i32 = arith.constant 3 : i32
    %c8_i32_58 = arith.constant 8 : i32
    %146 = arith.muli %c3_i32, %c8_i32_58 : i32
    %147 = tpu.assume_multiple %146, 8 : i32
    %148 = arith.index_cast %147 : i32 to index
    %c0_59 = arith.constant 0 : index
    %149 = vector.load %arg7[%148, %c0_59] : memref<64x512xf32, #tpu.memory_space<vmem>>, vector<8x512xf32>
    %150 = arith.truncf %145 : vector<8x128xf32> to vector<8x128xbf16>
    %c0_60 = arith.constant 0 : index
    %c0_61 = arith.constant 0 : index
    %151 = vector.load %arg2[%c0_60, %c0_61] : memref<128x512xbf16, #tpu.memory_space<vmem>>, vector<128x512xbf16>
    %cst_62 = arith.constant dense<0.000000e+00> : vector<8x512xf32>
    %152 = tpu.matmul %150, %151, %cst_62 {dimension_numbers = #tpu.dot_dimension_numbers<[1], [0], [0], [1], [0, 0, 1, 1], [], []>} : vector<8x128xbf16>, vector<128x512xbf16>, vector<8x512xf32> -> vector<8x512xf32>
    %153 = arith.addf %149, %152 : vector<8x512xf32>
    %154 = vector.extract_strided_slice %153 {offsets = [0, 0], sizes = [8, 128], strides = [1, 1]} : vector<8x512xf32> to vector<8x128xf32>
    %cst_63 = arith.constant 5.000000e-01 : f32
    %155 = vector.broadcast %cst_63 : f32 to vector<8x128xf32>
    %156 = arith.mulf %155, %154 : vector<8x128xf32>
    %157 = math.tanh %156 : vector<8x128xf32>
    %cst_64 = arith.constant 1.000000e+00 : f32
    %158 = vector.broadcast %cst_64 : f32 to vector<8x128xf32>
    %159 = arith.addf %157, %158 : vector<8x128xf32>
    %cst_65 = arith.constant 5.000000e-01 : f32
    %160 = vector.broadcast %cst_65 : f32 to vector<8x128xf32>
    %161 = arith.mulf %160, %159 : vector<8x128xf32>
    %162 = vector.extract_strided_slice %153 {offsets = [0, 128], sizes = [8, 128], strides = [1, 1]} : vector<8x512xf32> to vector<8x128xf32>
    %cst_66 = arith.constant 5.000000e-01 : f32
    %163 = vector.broadcast %cst_66 : f32 to vector<8x128xf32>
    %164 = arith.mulf %163, %162 : vector<8x128xf32>
    %165 = math.tanh %164 : vector<8x128xf32>
    %cst_67 = arith.constant 1.000000e+00 : f32
    %166 = vector.broadcast %cst_67 : f32 to vector<8x128xf32>
    %167 = arith.addf %165, %166 : vector<8x128xf32>
    %cst_68 = arith.constant 5.000000e-01 : f32
    %168 = vector.broadcast %cst_68 : f32 to vector<8x128xf32>
    %169 = arith.mulf %168, %167 : vector<8x128xf32>
    %170 = vector.extract_strided_slice %153 {offsets = [0, 256], sizes = [8, 128], strides = [1, 1]} : vector<8x512xf32> to vector<8x128xf32>
    %171 = math.tanh %170 : vector<8x128xf32>
    %172 = vector.extract_strided_slice %153 {offsets = [0, 384], sizes = [8, 128], strides = [1, 1]} : vector<8x512xf32> to vector<8x128xf32>
    %cst_69 = arith.constant 5.000000e-01 : f32
    %173 = vector.broadcast %cst_69 : f32 to vector<8x128xf32>
    %174 = arith.mulf %173, %172 : vector<8x128xf32>
    %175 = math.tanh %174 : vector<8x128xf32>
    %cst_70 = arith.constant 1.000000e+00 : f32
    %176 = vector.broadcast %cst_70 : f32 to vector<8x128xf32>
    %177 = arith.addf %175, %176 : vector<8x128xf32>
    %cst_71 = arith.constant 5.000000e-01 : f32
    %178 = vector.broadcast %cst_71 : f32 to vector<8x128xf32>
    %179 = arith.mulf %178, %177 : vector<8x128xf32>
    %180 = arith.mulf %169, %143 : vector<8x128xf32>
    %181 = arith.mulf %161, %171 : vector<8x128xf32>
    %182 = arith.addf %180, %181 : vector<8x128xf32>
    %183 = math.tanh %182 : vector<8x128xf32>
    %184 = arith.mulf %179, %183 : vector<8x128xf32>
    %c4_i32 = arith.constant 4 : i32
    %c8_i32_72 = arith.constant 8 : i32
    %185 = arith.muli %c4_i32, %c8_i32_72 : i32
    %186 = tpu.assume_multiple %185, 8 : i32
    %187 = arith.index_cast %186 : i32 to index
    %c0_73 = arith.constant 0 : index
    %188 = vector.load %arg7[%187, %c0_73] : memref<64x512xf32, #tpu.memory_space<vmem>>, vector<8x512xf32>
    %189 = arith.truncf %184 : vector<8x128xf32> to vector<8x128xbf16>
    %c0_74 = arith.constant 0 : index
    %c0_75 = arith.constant 0 : index
    %190 = vector.load %arg2[%c0_74, %c0_75] : memref<128x512xbf16, #tpu.memory_space<vmem>>, vector<128x512xbf16>
    %cst_76 = arith.constant dense<0.000000e+00> : vector<8x512xf32>
    %191 = tpu.matmul %189, %190, %cst_76 {dimension_numbers = #tpu.dot_dimension_numbers<[1], [0], [0], [1], [0, 0, 1, 1], [], []>} : vector<8x128xbf16>, vector<128x512xbf16>, vector<8x512xf32> -> vector<8x512xf32>
    %192 = arith.addf %188, %191 : vector<8x512xf32>
    %193 = vector.extract_strided_slice %192 {offsets = [0, 0], sizes = [8, 128], strides = [1, 1]} : vector<8x512xf32> to vector<8x128xf32>
    %cst_77 = arith.constant 5.000000e-01 : f32
    %194 = vector.broadcast %cst_77 : f32 to vector<8x128xf32>
    %195 = arith.mulf %194, %193 : vector<8x128xf32>
    %196 = math.tanh %195 : vector<8x128xf32>
    %cst_78 = arith.constant 1.000000e+00 : f32
    %197 = vector.broadcast %cst_78 : f32 to vector<8x128xf32>
    %198 = arith.addf %196, %197 : vector<8x128xf32>
    %cst_79 = arith.constant 5.000000e-01 : f32
    %199 = vector.broadcast %cst_79 : f32 to vector<8x128xf32>
    %200 = arith.mulf %199, %198 : vector<8x128xf32>
    %201 = vector.extract_strided_slice %192 {offsets = [0, 128], sizes = [8, 128], strides = [1, 1]} : vector<8x512xf32> to vector<8x128xf32>
    %cst_80 = arith.constant 5.000000e-01 : f32
    %202 = vector.broadcast %cst_80 : f32 to vector<8x128xf32>
    %203 = arith.mulf %202, %201 : vector<8x128xf32>
    %204 = math.tanh %203 : vector<8x128xf32>
    %cst_81 = arith.constant 1.000000e+00 : f32
    %205 = vector.broadcast %cst_81 : f32 to vector<8x128xf32>
    %206 = arith.addf %204, %205 : vector<8x128xf32>
    %cst_82 = arith.constant 5.000000e-01 : f32
    %207 = vector.broadcast %cst_82 : f32 to vector<8x128xf32>
    %208 = arith.mulf %207, %206 : vector<8x128xf32>
    %209 = vector.extract_strided_slice %192 {offsets = [0, 256], sizes = [8, 128], strides = [1, 1]} : vector<8x512xf32> to vector<8x128xf32>
    %210 = math.tanh %209 : vector<8x128xf32>
    %211 = vector.extract_strided_slice %192 {offsets = [0, 384], sizes = [8, 128], strides = [1, 1]} : vector<8x512xf32> to vector<8x128xf32>
    %cst_83 = arith.constant 5.000000e-01 : f32
    %212 = vector.broadcast %cst_83 : f32 to vector<8x128xf32>
    %213 = arith.mulf %212, %211 : vector<8x128xf32>
    %214 = math.tanh %213 : vector<8x128xf32>
    %cst_84 = arith.constant 1.000000e+00 : f32
    %215 = vector.broadcast %cst_84 : f32 to vector<8x128xf32>
    %216 = arith.addf %214, %215 : vector<8x128xf32>
    %cst_85 = arith.constant 5.000000e-01 : f32
    %217 = vector.broadcast %cst_85 : f32 to vector<8x128xf32>
    %218 = arith.mulf %217, %216 : vector<8x128xf32>
    %219 = arith.mulf %208, %182 : vector<8x128xf32>
    %220 = arith.mulf %200, %210 : vector<8x128xf32>
    %221 = arith.addf %219, %220 : vector<8x128xf32>
    %222 = math.tanh %221 : vector<8x128xf32>
    %223 = arith.mulf %218, %222 : vector<8x128xf32>
    %c5_i32 = arith.constant 5 : i32
    %c8_i32_86 = arith.constant 8 : i32
    %224 = arith.muli %c5_i32, %c8_i32_86 : i32
    %225 = tpu.assume_multiple %224, 8 : i32
    %226 = arith.index_cast %225 : i32 to index
    %c0_87 = arith.constant 0 : index
    %227 = vector.load %arg7[%226, %c0_87] : memref<64x512xf32, #tpu.memory_space<vmem>>, vector<8x512xf32>
    %228 = arith.truncf %223 : vector<8x128xf32> to vector<8x128xbf16>
    %c0_88 = arith.constant 0 : index
    %c0_89 = arith.constant 0 : index
    %229 = vector.load %arg2[%c0_88, %c0_89] : memref<128x512xbf16, #tpu.memory_space<vmem>>, vector<128x512xbf16>
    %cst_90 = arith.constant dense<0.000000e+00> : vector<8x512xf32>
    %230 = tpu.matmul %228, %229, %cst_90 {dimension_numbers = #tpu.dot_dimension_numbers<[1], [0], [0], [1], [0, 0, 1, 1], [], []>} : vector<8x128xbf16>, vector<128x512xbf16>, vector<8x512xf32> -> vector<8x512xf32>
    %231 = arith.addf %227, %230 : vector<8x512xf32>
    %232 = vector.extract_strided_slice %231 {offsets = [0, 0], sizes = [8, 128], strides = [1, 1]} : vector<8x512xf32> to vector<8x128xf32>
    %cst_91 = arith.constant 5.000000e-01 : f32
    %233 = vector.broadcast %cst_91 : f32 to vector<8x128xf32>
    %234 = arith.mulf %233, %232 : vector<8x128xf32>
    %235 = math.tanh %234 : vector<8x128xf32>
    %cst_92 = arith.constant 1.000000e+00 : f32
    %236 = vector.broadcast %cst_92 : f32 to vector<8x128xf32>
    %237 = arith.addf %235, %236 : vector<8x128xf32>
    %cst_93 = arith.constant 5.000000e-01 : f32
    %238 = vector.broadcast %cst_93 : f32 to vector<8x128xf32>
    %239 = arith.mulf %238, %237 : vector<8x128xf32>
    %240 = vector.extract_strided_slice %231 {offsets = [0, 128], sizes = [8, 128], strides = [1, 1]} : vector<8x512xf32> to vector<8x128xf32>
    %cst_94 = arith.constant 5.000000e-01 : f32
    %241 = vector.broadcast %cst_94 : f32 to vector<8x128xf32>
    %242 = arith.mulf %241, %240 : vector<8x128xf32>
    %243 = math.tanh %242 : vector<8x128xf32>
    %cst_95 = arith.constant 1.000000e+00 : f32
    %244 = vector.broadcast %cst_95 : f32 to vector<8x128xf32>
    %245 = arith.addf %243, %244 : vector<8x128xf32>
    %cst_96 = arith.constant 5.000000e-01 : f32
    %246 = vector.broadcast %cst_96 : f32 to vector<8x128xf32>
    %247 = arith.mulf %246, %245 : vector<8x128xf32>
    %248 = vector.extract_strided_slice %231 {offsets = [0, 256], sizes = [8, 128], strides = [1, 1]} : vector<8x512xf32> to vector<8x128xf32>
    %249 = math.tanh %248 : vector<8x128xf32>
    %250 = vector.extract_strided_slice %231 {offsets = [0, 384], sizes = [8, 128], strides = [1, 1]} : vector<8x512xf32> to vector<8x128xf32>
    %cst_97 = arith.constant 5.000000e-01 : f32
    %251 = vector.broadcast %cst_97 : f32 to vector<8x128xf32>
    %252 = arith.mulf %251, %250 : vector<8x128xf32>
    %253 = math.tanh %252 : vector<8x128xf32>
    %cst_98 = arith.constant 1.000000e+00 : f32
    %254 = vector.broadcast %cst_98 : f32 to vector<8x128xf32>
    %255 = arith.addf %253, %254 : vector<8x128xf32>
    %cst_99 = arith.constant 5.000000e-01 : f32
    %256 = vector.broadcast %cst_99 : f32 to vector<8x128xf32>
    %257 = arith.mulf %256, %255 : vector<8x128xf32>
    %258 = arith.mulf %247, %221 : vector<8x128xf32>
    %259 = arith.mulf %239, %249 : vector<8x128xf32>
    %260 = arith.addf %258, %259 : vector<8x128xf32>
    %261 = math.tanh %260 : vector<8x128xf32>
    %262 = arith.mulf %257, %261 : vector<8x128xf32>
    %c6_i32 = arith.constant 6 : i32
    %c8_i32_100 = arith.constant 8 : i32
    %263 = arith.muli %c6_i32, %c8_i32_100 : i32
    %264 = tpu.assume_multiple %263, 8 : i32
    %265 = arith.index_cast %264 : i32 to index
    %c0_101 = arith.constant 0 : index
    %266 = vector.load %arg7[%265, %c0_101] : memref<64x512xf32, #tpu.memory_space<vmem>>, vector<8x512xf32>
    %267 = arith.truncf %262 : vector<8x128xf32> to vector<8x128xbf16>
    %c0_102 = arith.constant 0 : index
    %c0_103 = arith.constant 0 : index
    %268 = vector.load %arg2[%c0_102, %c0_103] : memref<128x512xbf16, #tpu.memory_space<vmem>>, vector<128x512xbf16>
    %cst_104 = arith.constant dense<0.000000e+00> : vector<8x512xf32>
    %269 = tpu.matmul %267, %268, %cst_104 {dimension_numbers = #tpu.dot_dimension_numbers<[1], [0], [0], [1], [0, 0, 1, 1], [], []>} : vector<8x128xbf16>, vector<128x512xbf16>, vector<8x512xf32> -> vector<8x512xf32>
    %270 = arith.addf %266, %269 : vector<8x512xf32>
    %271 = vector.extract_strided_slice %270 {offsets = [0, 0], sizes = [8, 128], strides = [1, 1]} : vector<8x512xf32> to vector<8x128xf32>
    %cst_105 = arith.constant 5.000000e-01 : f32
    %272 = vector.broadcast %cst_105 : f32 to vector<8x128xf32>
    %273 = arith.mulf %272, %271 : vector<8x128xf32>
    %274 = math.tanh %273 : vector<8x128xf32>
    %cst_106 = arith.constant 1.000000e+00 : f32
    %275 = vector.broadcast %cst_106 : f32 to vector<8x128xf32>
    %276 = arith.addf %274, %275 : vector<8x128xf32>
    %cst_107 = arith.constant 5.000000e-01 : f32
    %277 = vector.broadcast %cst_107 : f32 to vector<8x128xf32>
    %278 = arith.mulf %277, %276 : vector<8x128xf32>
    %279 = vector.extract_strided_slice %270 {offsets = [0, 128], sizes = [8, 128], strides = [1, 1]} : vector<8x512xf32> to vector<8x128xf32>
    %cst_108 = arith.constant 5.000000e-01 : f32
    %280 = vector.broadcast %cst_108 : f32 to vector<8x128xf32>
    %281 = arith.mulf %280, %279 : vector<8x128xf32>
    %282 = math.tanh %281 : vector<8x128xf32>
    %cst_109 = arith.constant 1.000000e+00 : f32
    %283 = vector.broadcast %cst_109 : f32 to vector<8x128xf32>
    %284 = arith.addf %282, %283 : vector<8x128xf32>
    %cst_110 = arith.constant 5.000000e-01 : f32
    %285 = vector.broadcast %cst_110 : f32 to vector<8x128xf32>
    %286 = arith.mulf %285, %284 : vector<8x128xf32>
    %287 = vector.extract_strided_slice %270 {offsets = [0, 256], sizes = [8, 128], strides = [1, 1]} : vector<8x512xf32> to vector<8x128xf32>
    %288 = math.tanh %287 : vector<8x128xf32>
    %289 = vector.extract_strided_slice %270 {offsets = [0, 384], sizes = [8, 128], strides = [1, 1]} : vector<8x512xf32> to vector<8x128xf32>
    %cst_111 = arith.constant 5.000000e-01 : f32
    %290 = vector.broadcast %cst_111 : f32 to vector<8x128xf32>
    %291 = arith.mulf %290, %289 : vector<8x128xf32>
    %292 = math.tanh %291 : vector<8x128xf32>
    %cst_112 = arith.constant 1.000000e+00 : f32
    %293 = vector.broadcast %cst_112 : f32 to vector<8x128xf32>
    %294 = arith.addf %292, %293 : vector<8x128xf32>
    %cst_113 = arith.constant 5.000000e-01 : f32
    %295 = vector.broadcast %cst_113 : f32 to vector<8x128xf32>
    %296 = arith.mulf %295, %294 : vector<8x128xf32>
    %297 = arith.mulf %286, %260 : vector<8x128xf32>
    %298 = arith.mulf %278, %288 : vector<8x128xf32>
    %299 = arith.addf %297, %298 : vector<8x128xf32>
    %300 = math.tanh %299 : vector<8x128xf32>
    %301 = arith.mulf %296, %300 : vector<8x128xf32>
    %c7_i32 = arith.constant 7 : i32
    %c8_i32_114 = arith.constant 8 : i32
    %302 = arith.muli %c7_i32, %c8_i32_114 : i32
    %303 = tpu.assume_multiple %302, 8 : i32
    %304 = arith.index_cast %303 : i32 to index
    %c0_115 = arith.constant 0 : index
    %305 = vector.load %arg7[%304, %c0_115] : memref<64x512xf32, #tpu.memory_space<vmem>>, vector<8x512xf32>
    %306 = arith.truncf %301 : vector<8x128xf32> to vector<8x128xbf16>
    %c0_116 = arith.constant 0 : index
    %c0_117 = arith.constant 0 : index
    %307 = vector.load %arg2[%c0_116, %c0_117] : memref<128x512xbf16, #tpu.memory_space<vmem>>, vector<128x512xbf16>
    %cst_118 = arith.constant dense<0.000000e+00> : vector<8x512xf32>
    %308 = tpu.matmul %306, %307, %cst_118 {dimension_numbers = #tpu.dot_dimension_numbers<[1], [0], [0], [1], [0, 0, 1, 1], [], []>} : vector<8x128xbf16>, vector<128x512xbf16>, vector<8x512xf32> -> vector<8x512xf32>
    %309 = arith.addf %305, %308 : vector<8x512xf32>
    %310 = vector.extract_strided_slice %309 {offsets = [0, 0], sizes = [8, 128], strides = [1, 1]} : vector<8x512xf32> to vector<8x128xf32>
    %cst_119 = arith.constant 5.000000e-01 : f32
    %311 = vector.broadcast %cst_119 : f32 to vector<8x128xf32>
    %312 = arith.mulf %311, %310 : vector<8x128xf32>
    %313 = math.tanh %312 : vector<8x128xf32>
    %cst_120 = arith.constant 1.000000e+00 : f32
    %314 = vector.broadcast %cst_120 : f32 to vector<8x128xf32>
    %315 = arith.addf %313, %314 : vector<8x128xf32>
    %cst_121 = arith.constant 5.000000e-01 : f32
    %316 = vector.broadcast %cst_121 : f32 to vector<8x128xf32>
    %317 = arith.mulf %316, %315 : vector<8x128xf32>
    %318 = vector.extract_strided_slice %309 {offsets = [0, 128], sizes = [8, 128], strides = [1, 1]} : vector<8x512xf32> to vector<8x128xf32>
    %cst_122 = arith.constant 5.000000e-01 : f32
    %319 = vector.broadcast %cst_122 : f32 to vector<8x128xf32>
    %320 = arith.mulf %319, %318 : vector<8x128xf32>
    %321 = math.tanh %320 : vector<8x128xf32>
    %cst_123 = arith.constant 1.000000e+00 : f32
    %322 = vector.broadcast %cst_123 : f32 to vector<8x128xf32>
    %323 = arith.addf %321, %322 : vector<8x128xf32>
    %cst_124 = arith.constant 5.000000e-01 : f32
    %324 = vector.broadcast %cst_124 : f32 to vector<8x128xf32>
    %325 = arith.mulf %324, %323 : vector<8x128xf32>
    %326 = vector.extract_strided_slice %309 {offsets = [0, 256], sizes = [8, 128], strides = [1, 1]} : vector<8x512xf32> to vector<8x128xf32>
    %327 = math.tanh %326 : vector<8x128xf32>
    %328 = vector.extract_strided_slice %309 {offsets = [0, 384], sizes = [8, 128], strides = [1, 1]} : vector<8x512xf32> to vector<8x128xf32>
    %cst_125 = arith.constant 5.000000e-01 : f32
    %329 = vector.broadcast %cst_125 : f32 to vector<8x128xf32>
    %330 = arith.mulf %329, %328 : vector<8x128xf32>
    %331 = math.tanh %330 : vector<8x128xf32>
    %cst_126 = arith.constant 1.000000e+00 : f32
    %332 = vector.broadcast %cst_126 : f32 to vector<8x128xf32>
    %333 = arith.addf %331, %332 : vector<8x128xf32>
    %cst_127 = arith.constant 5.000000e-01 : f32
    %334 = vector.broadcast %cst_127 : f32 to vector<8x128xf32>
    %335 = arith.mulf %334, %333 : vector<8x128xf32>
    %336 = arith.mulf %325, %299 : vector<8x128xf32>
    %337 = arith.mulf %317, %327 : vector<8x128xf32>
    %338 = arith.addf %336, %337 : vector<8x128xf32>
    %339 = math.tanh %338 : vector<8x128xf32>
    %340 = arith.mulf %335, %339 : vector<8x128xf32>
    %c8_i32_128 = arith.constant 8 : i32
    %c0_129 = arith.constant 0 : index
    %c0_130 = arith.constant 0 : index
    %341 = vector.load %arg4[%c0_129, %c0_130] : memref<1x128xf32, #tpu.memory_space<vmem>>, vector<1x128xf32>
    %342 = vector.broadcast %341 : vector<1x128xf32> to vector<8x128xf32>
    %343 = arith.mulf %340, %342 : vector<8x128xf32>
    %cst_131 = arith.constant dense<0.000000e+00> : vector<8xf32>
    %344 = vector.multi_reduction <add>, %343, %cst_131 [1] : vector<8x128xf32> to vector<8xf32>
    %345 = vector.shape_cast %344 : vector<8xf32> to vector<8x1xf32>
    %c0_132 = arith.constant 0 : index
    %c0_133 = arith.constant 0 : index
    %346 = vector.load %arg5[%c0_132, %c0_133] : memref<1x1xf32, #tpu.memory_space<vmem>>, vector<1x1xf32>
    %347 = vector.broadcast %346 : vector<1x1xf32> to vector<8x1xf32>
    %348 = arith.addf %345, %347 : vector<8x1xf32>
    %c0_134 = arith.constant 0 : index
    %c0_135 = arith.constant 0 : index
    %349 = vector.load %arg6[%c0_134, %c0_135] : memref<8x1xf32, #tpu.memory_space<vmem>>, vector<8x1xf32>
    tpu.vector_store %arg6[%c0_134, %c0_135], %348 {strides = array<i32>} : memref<8x1xf32, #tpu.memory_space<vmem>>, vector<8x1xf32>,
    return
  }
}

</mosaic_0001>

<llo_original>
// kernel: lstm_d_forward.1
$region0: #{lstm_d_forward.1}
  #allocation0 [shape = 'u32[]', space=smem, size = 0x4, offset = 0x4, fixed_abs, tag = 'smem constant byte address 0x4 - core index']
  #allocation1 [shape = 'u32[72,128]{1,0:T(1,128)}', space=vmem, size = 0x9000, scoped, tag = 'internal scratch']
  #allocation2 [shape = 'f32[64,512]{1,0:T(8,128)}', space=vmem, size = 0x20000, scoped, tag = 'scratch operand']
  #allocation3 [shape = 'f32[1,1]{1,0:T(1,128)S(1)}', space=vmem, size = 0x200, scoped, tag = 'scoped memory for lstm_d_forward.1']
  %s0 = inlined_call_operand.vmem [shape: f32[64,4], index: 0, kind: input, shape index: {}]
  %s1 = inlined_call_operand.vmem [shape: f32[4,512], index: 1, kind: input, shape index: {}]
  %s2 = inlined_call_operand.hbm [shape: bf16[128,512], index: 2, kind: input, shape index: {}]
  %s3 = inlined_call_operand.vmem [shape: f32[1,512], index: 3, kind: input, shape index: {}]
  %s4 = inlined_call_operand.vmem [shape: f32[1,128], index: 4, kind: input, shape index: {}]
  %s5 = inlined_call_operand.<no memory space> [shape: f32[1,1], index: 5, kind: input, shape index: {}]
  %s6 = inlined_call_operand.vmem [shape: f32[8,1], index: 6, kind: output, shape index: {}]
  %s7 = sld [smem:[#allocation0]]
  $region38: #{lstm_d_forward.1} parent=0
    _
  %s9 = ssub.s32 1, %s7
  %s10 = scalar_select 0, %s9, %s7
  %v11 = vstv %s5
  %12 = vst [vmem:[#allocation3] sm:$0x1] %v11
  $region1: #{lstm_d_forward.1} parent=0
    #allocation4 [shape = 'u8[131072]{0}', space=vmem, size = 0x20000, scoped, tag = 'input window, operand 2, single buffered']
    #allocation5 [shape = 's32[1]{0}', space=sflag, size = 0x4, scoped, tag = 'scoped memory for lstm_d_forward.1']
    %13 = vsyncpa [#allocation5], 0
    // Predicated region
    $region2: #{lstm_d_forward.1} parent=1 // pred_check
      _
    $region3: #{lstm_d_forward.1} parent=1 // pred_check_branch
      %15 = sbr.rel (0) target = $region5
    $region4: #{lstm_d_forward.1} parent=1 // pred_region
      _
    $region5: #{lstm_d_forward.1} parent=1 // pred_fallthru
      _
    // Predicated region
    $region6: #{lstm_d_forward.1} parent=1 // pred_check
      _
    $region7: #{lstm_d_forward.1} parent=1 // pred_check_branch
      %17 = sbr.rel (0) target = $region9
    $region8: #{lstm_d_forward.1} parent=1 // pred_region
      _
    $region9: #{lstm_d_forward.1} parent=1 // pred_fallthru
      _
    // Predicated region
    $region10: #{lstm_d_forward.1} parent=1 // pred_check
      _
    $region11: #{lstm_d_forward.1} parent=1 // pred_check_branch
      %19 = sbr.rel (0) target = $region13
    $region12: #{lstm_d_forward.1} parent=1 // pred_region
      %21 = vsyncadd [#allocation5], 0
      %s22 = sshll.u32 %s2, 4
      %s23 = int_to_ptr.hbm [resolvable:$true] %s22
      %s24 = sshll.u32 [#allocation4], 4
      %s25 = int_to_ptr.vmem [resolvable:$true] %s24
      %30 = dma.hbm_to_vmem [thread:$0]  %s23, 4096, %s25, [#allocation5], 256, 256, 16
    $region13: #{lstm_d_forward.1} parent=1 // pred_fallthru
      _
    // Predicated region
    $region14: #{lstm_d_forward.1} parent=1 // pred_check
      _
    $region15: #{lstm_d_forward.1} parent=1 // pred_check_branch
      %32 = sbr.rel (0) target = $region17
    $region16: #{lstm_d_forward.1} parent=1 // pred_region
      _
    $region17: #{lstm_d_forward.1} parent=1 // pred_fallthru
      _
    // Predicated region
    $region18: #{lstm_d_forward.1} parent=1 // pred_check
      _
    $region19: #{lstm_d_forward.1} parent=1 // pred_check_branch
      %34 = sbr.rel (0) target = $region21
    $region20: #{lstm_d_forward.1} parent=1 // pred_region
      _
    $region21: #{lstm_d_forward.1} parent=1 // pred_fallthru
      _
    // Predicated region
    $region22: #{lstm_d_forward.1} parent=1 // pred_check
      _
    $region23: #{lstm_d_forward.1} parent=1 // pred_check_branch
      %36 = sbr.rel (0) target = $region25
    $region24: #{lstm_d_forward.1} parent=1 // pred_region
      _
    $region25: #{lstm_d_forward.1} parent=1 // pred_fallthru
      _
    // Predicated region
    $region26: #{lstm_d_forward.1} parent=1 // pred_check
      _
    $region27: #{lstm_d_forward.1} parent=1 // pred_check_branch
      %38 = sbr.rel (0) target = $region29
    $region28: #{lstm_d_forward.1} parent=1 // pred_region
      %40 = dma.done [#allocation5], 4096
    $region29: #{lstm_d_forward.1} parent=1 // pred_fallthru
      _
    %v42 = vld [vmem:[%s0] sm:$0xff]
    %v43 = vld [vmem:[%s0 + $0x8] sm:$0xff]
    %v44 = vld [vmem:[%s0 + $0x10] sm:$0xff]
    %v45 = vld [vmem:[%s0 + $0x18] sm:$0xff]
    %v46 = vld [vmem:[%s0 + $0x20] sm:$0xff]
    %v47 = vld [vmem:[%s0 + $0x28] sm:$0xff]
    %v48 = vld [vmem:[%s0 + $0x30] sm:$0xff]
    %v49 = vld [vmem:[%s0 + $0x38] sm:$0xff]
    %v50 = vld [vmem:[%s1] ss:$4 sm:$0xf]
    %52 = vset.pattern.permute.xlu0 0
    %53 = vperm.xlu0 %52, %v42
    %v54 = vpop.permute.xlu0 %53
    %57 = vset.pattern.permute.xlu0 0
    %58 = vperm.xlu0 %57, %v43
    %v59 = vpop.permute.xlu0 %58
    %62 = vset.pattern.permute.xlu0 0
    %63 = vperm.xlu0 %62, %v44
    %v64 = vpop.permute.xlu0 %63
    %67 = vset.pattern.permute.xlu0 0
    %68 = vperm.xlu0 %67, %v45
    %v69 = vpop.permute.xlu0 %68
    %72 = vset.pattern.permute.xlu0 0
    %73 = vperm.xlu0 %72, %v46
    %v74 = vpop.permute.xlu0 %73
    %77 = vset.pattern.permute.xlu0 0
    %78 = vperm.xlu0 %77, %v47
    %v79 = vpop.permute.xlu0 %78
    %82 = vset.pattern.permute.xlu0 0
    %83 = vperm.xlu0 %82, %v48
    %v84 = vpop.permute.xlu0 %83
    %87 = vset.pattern.permute.xlu0 0
    %88 = vperm.xlu0 %87, %v49
    %v89 = vpop.permute.xlu0 %88
    %v92 = vperm.slane %v50, 0
    %v93 = vperm.slane %v50, 1
    %v94 = vperm.slane %v50, 2
    %v95 = vperm.slane %v50, 3
    %v100 = vmul.f32 %v54, %v92
    %v101 = vmul.f32 %v54, %v93
    %v102 = vmul.f32 %v54, %v94
    %v103 = vmul.f32 %v54, %v95
    %v104 = vmul.f32 %v59, %v92
    %v105 = vmul.f32 %v59, %v93
    %v106 = vmul.f32 %v59, %v94
    %v107 = vmul.f32 %v59, %v95
    %v108 = vmul.f32 %v64, %v92
    %v109 = vmul.f32 %v64, %v93
    %v110 = vmul.f32 %v64, %v94
    %v111 = vmul.f32 %v64, %v95
    %v112 = vmul.f32 %v69, %v92
    %v113 = vmul.f32 %v69, %v93
    %v114 = vmul.f32 %v69, %v94
    %v115 = vmul.f32 %v69, %v95
    %v116 = vmul.f32 %v74, %v92
    %v117 = vmul.f32 %v74, %v93
    %v118 = vmul.f32 %v74, %v94
    %v119 = vmul.f32 %v74, %v95
    %v120 = vmul.f32 %v79, %v92
    %v121 = vmul.f32 %v79, %v93
    %v122 = vmul.f32 %v79, %v94
    %v123 = vmul.f32 %v79, %v95
    %v124 = vmul.f32 %v84, %v92
    %v125 = vmul.f32 %v84, %v93
    %v126 = vmul.f32 %v84, %v94
    %v127 = vmul.f32 %v84, %v95
    %v128 = vmul.f32 %v89, %v92
    %v129 = vmul.f32 %v89, %v93
    %v130 = vmul.f32 %v89, %v94
    %v131 = vmul.f32 %v89, %v95
    %v132 = vld [vmem:[%s3] sm:$0xf]
    %v134 = vperm.slane %v132, 0
    %v135 = vperm.slane %v132, 1
    %v136 = vperm.slane %v132, 2
    %v137 = vperm.slane %v132, 3
    %v142 = vadd.f32 %v100, %v134
    %v143 = vadd.f32 %v101, %v135
    %v144 = vadd.f32 %v102, %v136
    %v145 = vadd.f32 %v103, %v137
    %v146 = vadd.f32 %v104, %v134
    %v147 = vadd.f32 %v105, %v135
    %v148 = vadd.f32 %v106, %v136
    %v149 = vadd.f32 %v107, %v137
    %v150 = vadd.f32 %v108, %v134
    %v151 = vadd.f32 %v109, %v135
    %v152 = vadd.f32 %v110, %v136
    %v153 = vadd.f32 %v111, %v137
    %v154 = vadd.f32 %v112, %v134
    %v155 = vadd.f32 %v113, %v135
    %v156 = vadd.f32 %v114, %v136
    %v157 = vadd.f32 %v115, %v137
    %v158 = vadd.f32 %v116, %v134
    %v159 = vadd.f32 %v117, %v135
    %v160 = vadd.f32 %v118, %v136
    %v161 = vadd.f32 %v119, %v137
    %v162 = vadd.f32 %v120, %v134
    %v163 = vadd.f32 %v121, %v135
    %v164 = vadd.f32 %v122, %v136
    %v165 = vadd.f32 %v123, %v137
    %v166 = vadd.f32 %v124, %v134
    %v167 = vadd.f32 %v125, %v135
    %v168 = vadd.f32 %v126, %v136
    %v169 = vadd.f32 %v127, %v137
    %v170 = vadd.f32 %v128, %v134
    %v171 = vadd.f32 %v129, %v135
    %v172 = vadd.f32 %v130, %v136
    %v173 = vadd.f32 %v131, %v137
    %s174 = scalar_lea.vmem %s1, 1
    %v175 = vld [vmem:[%s174] ss:$4 sm:$0xf]
    %176 = vset.pattern.permute.xlu0 1
    %177 = vperm.xlu0 %176, %v42
    %v178 = vpop.permute.xlu0 %177
    %180 = vset.pattern.permute.xlu0 1
    %181 = vperm.xlu0 %180, %v43
    %v182 = vpop.permute.xlu0 %181
    %184 = vset.pattern.permute.xlu0 1
    %185 = vperm.xlu0 %184, %v44
    %v186 = vpop.permute.xlu0 %185
    %188 = vset.pattern.permute.xlu0 1
    %189 = vperm.xlu0 %188, %v45
    %v190 = vpop.permute.xlu0 %189
    %192 = vset.pattern.permute.xlu0 1
    %193 = vperm.xlu0 %192, %v46
    %v194 = vpop.permute.xlu0 %193
    %196 = vset.pattern.permute.xlu0 1
    %197 = vperm.xlu0 %196, %v47
    %v198 = vpop.permute.xlu0 %197
    %200 = vset.pattern.permute.xlu0 1
    %201 = vperm.xlu0 %200, %v48
    %v202 = vpop.permute.xlu0 %201
    %204 = vset.pattern.permute.xlu0 1
    %205 = vperm.xlu0 %204, %v49
    %v206 = vpop.permute.xlu0 %205
    %v209 = vperm.slane %v175, 0
    %v210 = vperm.slane %v175, 1
    %v211 = vperm.slane %v175, 2
    %v212 = vperm.slane %v175, 3
    %v217 = vmul.f32 %v178, %v209
    %v218 = vmul.f32 %v178, %v210
    %v219 = vmul.f32 %v178, %v211
    %v220 = vmul.f32 %v178, %v212
    %v221 = vmul.f32 %v182, %v209
    %v222 = vmul.f32 %v182, %v210
    %v223 = vmul.f32 %v182, %v211
    %v224 = vmul.f32 %v182, %v212
    %v225 = vmul.f32 %v186, %v209
    %v226 = vmul.f32 %v186, %v210
    %v227 = vmul.f32 %v186, %v211
    %v228 = vmul.f32 %v186, %v212
    %v229 = vmul.f32 %v190, %v209
    %v230 = vmul.f32 %v190, %v210
    %v231 = vmul.f32 %v190, %v211
    %v232 = vmul.f32 %v190, %v212
    %v233 = vmul.f32 %v194, %v209
    %v234 = vmul.f32 %v194, %v210
    %v235 = vmul.f32 %v194, %v211
    %v236 = vmul.f32 %v194, %v212
    %v237 = vmul.f32 %v198, %v209
    %v238 = vmul.f32 %v198, %v210
    %v239 = vmul.f32 %v198, %v211
    %v240 = vmul.f32 %v198, %v212
    %v241 = vmul.f32 %v202, %v209
    %v242 = vmul.f32 %v202, %v210
    %v243 = vmul.f32 %v202, %v211
    %v244 = vmul.f32 %v202, %v212
    %v245 = vmul.f32 %v206, %v209
    %v246 = vmul.f32 %v206, %v210
    %v247 = vmul.f32 %v206, %v211
    %v248 = vmul.f32 %v206, %v212
    %v249 = vadd.f32 %v142, %v217
    %v250 = vadd.f32 %v143, %v218
    %v251 = vadd.f32 %v144, %v219
    %v252 = vadd.f32 %v145, %v220
    %v253 = vadd.f32 %v146, %v221
    %v254 = vadd.f32 %v147, %v222
    %v255 = vadd.f32 %v148, %v223
    %v256 = vadd.f32 %v149, %v224
    %v257 = vadd.f32 %v150, %v225
    %v258 = vadd.f32 %v151, %v226
    %v259 = vadd.f32 %v152, %v227
    %v260 = vadd.f32 %v153, %v228
    %v261 = vadd.f32 %v154, %v229
    %v262 = vadd.f32 %v155, %v230
    %v263 = vadd.f32 %v156, %v231
    %v264 = vadd.f32 %v157, %v232
    %v265 = vadd.f32 %v158, %v233
    %v266 = vadd.f32 %v159, %v234
    %v267 = vadd.f32 %v160, %v235
    %v268 = vadd.f32 %v161, %v236
    %v269 = vadd.f32 %v162, %v237
    %v270 = vadd.f32 %v163, %v238
    %v271 = vadd.f32 %v164, %v239
    %v272 = vadd.f32 %v165, %v240
    %v273 = vadd.f32 %v166, %v241
    %v274 = vadd.f32 %v167, %v242
    %v275 = vadd.f32 %v168, %v243
    %v276 = vadd.f32 %v169, %v244
    %v277 = vadd.f32 %v170, %v245
    %v278 = vadd.f32 %v171, %v246
    %v279 = vadd.f32 %v172, %v247
    %v280 = vadd.f32 %v173, %v248
    %s281 = scalar_lea.vmem %s1, 2
    %v282 = vld [vmem:[%s281] ss:$4 sm:$0xf]
    %283 = vset.pattern.permute.xlu0 2
    %284 = vperm.xlu0 %283, %v42
    %v285 = vpop.permute.xlu0 %284
    %287 = vset.pattern.permute.xlu0 2
    %288 = vperm.xlu0 %287, %v43
    %v289 = vpop.permute.xlu0 %288
    %291 = vset.pattern.permute.xlu0 2
    %292 = vperm.xlu0 %291, %v44
    %v293 = vpop.permute.xlu0 %292
    %295 = vset.pattern.permute.xlu0 2
    %296 = vperm.xlu0 %295, %v45
    %v297 = vpop.permute.xlu0 %296
    %299 = vset.pattern.permute.xlu0 2
    %300 = vperm.xlu0 %299, %v46
    %v301 = vpop.permute.xlu0 %300
    %303 = vset.pattern.permute.xlu0 2
    %304 = vperm.xlu0 %303, %v47
    %v305 = vpop.permute.xlu0 %304
    %307 = vset.pattern.permute.xlu0 2
    %308 = vperm.xlu0 %307, %v48
    %v309 = vpop.permute.xlu0 %308
    %311 = vset.pattern.permute.xlu0 2
    %312 = vperm.xlu0 %311, %v49
    %v313 = vpop.permute.xlu0 %312
    %v316 = vperm.slane %v282, 0
    %v317 = vperm.slane %v282, 1
    %v318 = vperm.slane %v282, 2
    %v319 = vperm.slane %v282, 3
    %v324 = vmul.f32 %v285, %v316
    %v325 = vmul.f32 %v285, %v317
    %v326 = vmul.f32 %v285, %v318
    %v327 = vmul.f32 %v285, %v319
    %v328 = vmul.f32 %v289, %v316
    %v329 = vmul.f32 %v289, %v317
    %v330 = vmul.f32 %v289, %v318
    %v331 = vmul.f32 %v289, %v319
    %v332 = vmul.f32 %v293, %v316
    %v333 = vmul.f32 %v293, %v317
    %v334 = vmul.f32 %v293, %v318
    %v335 = vmul.f32 %v293, %v319
    %v336 = vmul.f32 %v297, %v316
    %v337 = vmul.f32 %v297, %v317
    %v338 = vmul.f32 %v297, %v318
    %v339 = vmul.f32 %v297, %v319
    %v340 = vmul.f32 %v301, %v316
    %v341 = vmul.f32 %v301, %v317
    %v342 = vmul.f32 %v301, %v318
    %v343 = vmul.f32 %v301, %v319
    %v344 = vmul.f32 %v305, %v316
    %v345 = vmul.f32 %v305, %v317
    %v346 = vmul.f32 %v305, %v318
    %v347 = vmul.f32 %v305, %v319
    %v348 = vmul.f32 %v309, %v316
    %v349 = vmul.f32 %v309, %v317
    %v350 = vmul.f32 %v309, %v318
    %v351 = vmul.f32 %v309, %v319
    %v352 = vmul.f32 %v313, %v316
    %v353 = vmul.f32 %v313, %v317
    %v354 = vmul.f32 %v313, %v318
    %v355 = vmul.f32 %v313, %v319
    %v356 = vadd.f32 %v249, %v324
    %v357 = vadd.f32 %v250, %v325
    %v358 = vadd.f32 %v251, %v326
    %v359 = vadd.f32 %v252, %v327
    %v360 = vadd.f32 %v253, %v328
    %v361 = vadd.f32 %v254, %v329
    %v362 = vadd.f32 %v255, %v330
    %v363 = vadd.f32 %v256, %v331
    %v364 = vadd.f32 %v257, %v332
    %v365 = vadd.f32 %v258, %v333
    %v366 = vadd.f32 %v259, %v334
    %v367 = vadd.f32 %v260, %v335
    %v368 = vadd.f32 %v261, %v336
    %v369 = vadd.f32 %v262, %v337
    %v370 = vadd.f32 %v263, %v338
    %v371 = vadd.f32 %v264, %v339
    %v372 = vadd.f32 %v265, %v340
    %v373 = vadd.f32 %v266, %v341
    %v374 = vadd.f32 %v267, %v342
    %v375 = vadd.f32 %v268, %v343
    %v376 = vadd.f32 %v269, %v344
    %v377 = vadd.f32 %v270, %v345
    %v378 = vadd.f32 %v271, %v346
    %v379 = vadd.f32 %v272, %v347
    %v380 = vadd.f32 %v273, %v348
    %v381 = vadd.f32 %v274, %v349
    %v382 = vadd.f32 %v275, %v350
    %v383 = vadd.f32 %v276, %v351
    %v384 = vadd.f32 %v277, %v352
    %v385 = vadd.f32 %v278, %v353
    %v386 = vadd.f32 %v279, %v354
    %v387 = vadd.f32 %v280, %v355
    %s388 = scalar_lea.vmem %s1, 3
    %v389 = vld [vmem:[%s388] ss:$4 sm:$0xf]
    %390 = vset.pattern.permute.xlu0 3
    %391 = vperm.xlu0 %390, %v42
    %v392 = vpop.permute.xlu0 %391
    %394 = vset.pattern.permute.xlu0 3
    %395 = vperm.xlu0 %394, %v43
    %v396 = vpop.permute.xlu0 %395
    %398 = vset.pattern.permute.xlu0 3
    %399 = vperm.xlu0 %398, %v44
    %v400 = vpop.permute.xlu0 %399
    %402 = vset.pattern.permute.xlu0 3
    %403 = vperm.xlu0 %402, %v45
    %v404 = vpop.permute.xlu0 %403
    %406 = vset.pattern.permute.xlu0 3
    %407 = vperm.xlu0 %406, %v46
    %v408 = vpop.permute.xlu0 %407
    %410 = vset.pattern.permute.xlu0 3
    %411 = vperm.xlu0 %410, %v47
    %v412 = vpop.permute.xlu0 %411
    %414 = vset.pattern.permute.xlu0 3
    %415 = vperm.xlu0 %414, %v48
    %v416 = vpop.permute.xlu0 %415
    %418 = vset.pattern.permute.xlu0 3
    %419 = vperm.xlu0 %418, %v49
    %v420 = vpop.permute.xlu0 %419
    %v423 = vperm.slane %v389, 0
    %v424 = vperm.slane %v389, 1
    %v425 = vperm.slane %v389, 2
    %v426 = vperm.slane %v389, 3
    %v431 = vmul.f32 %v392, %v423
    %v432 = vmul.f32 %v392, %v424
    %v433 = vmul.f32 %v392, %v425
    %v434 = vmul.f32 %v392, %v426
    %v435 = vmul.f32 %v396, %v423
    %v436 = vmul.f32 %v396, %v424
    %v437 = vmul.f32 %v396, %v425
    %v438 = vmul.f32 %v396, %v426
    %v439 = vmul.f32 %v400, %v423
    %v440 = vmul.f32 %v400, %v424
    %v441 = vmul.f32 %v400, %v425
    %v442 = vmul.f32 %v400, %v426
    %v443 = vmul.f32 %v404, %v423
    %v444 = vmul.f32 %v404, %v424
    %v445 = vmul.f32 %v404, %v425
    %v446 = vmul.f32 %v404, %v426
    %v447 = vmul.f32 %v408, %v423
    %v448 = vmul.f32 %v408, %v424
    %v449 = vmul.f32 %v408, %v425
    %v450 = vmul.f32 %v408, %v426
    %v451 = vmul.f32 %v412, %v423
    %v452 = vmul.f32 %v412, %v424
    %v453 = vmul.f32 %v412, %v425
    %v454 = vmul.f32 %v412, %v426
    %v455 = vmul.f32 %v416, %v423
    %v456 = vmul.f32 %v416, %v424
    %v457 = vmul.f32 %v416, %v425
    %v458 = vmul.f32 %v416, %v426
    %v459 = vmul.f32 %v420, %v423
    %v460 = vmul.f32 %v420, %v424
    %v461 = vmul.f32 %v420, %v425
    %v462 = vmul.f32 %v420, %v426
    %v463 = vadd.f32 %v356, %v431
    %v464 = vadd.f32 %v357, %v432
    %v465 = vadd.f32 %v358, %v433
    %v466 = vadd.f32 %v359, %v434
    %v467 = vadd.f32 %v360, %v435
    %v468 = vadd.f32 %v361, %v436
    %v469 = vadd.f32 %v362, %v437
    %v470 = vadd.f32 %v363, %v438
    %v471 = vadd.f32 %v364, %v439
    %v472 = vadd.f32 %v365, %v440
    %v473 = vadd.f32 %v366, %v441
    %v474 = vadd.f32 %v367, %v442
    %v475 = vadd.f32 %v368, %v443
    %v476 = vadd.f32 %v369, %v444
    %v477 = vadd.f32 %v370, %v445
    %v478 = vadd.f32 %v371, %v446
    %v479 = vadd.f32 %v372, %v447
    %v480 = vadd.f32 %v373, %v448
    %v481 = vadd.f32 %v374, %v449
    %v482 = vadd.f32 %v375, %v450
    %v483 = vadd.f32 %v376, %v451
    %v484 = vadd.f32 %v377, %v452
    %v485 = vadd.f32 %v378, %v453
    %v486 = vadd.f32 %v379, %v454
    %v487 = vadd.f32 %v380, %v455
    %v488 = vadd.f32 %v381, %v456
    %v489 = vadd.f32 %v382, %v457
    %v490 = vadd.f32 %v383, %v458
    %v491 = vadd.f32 %v384, %v459
    %v492 = vadd.f32 %v385, %v460
    %v493 = vadd.f32 %v386, %v461
    %v494 = vadd.f32 %v387, %v462
    %495 = vst [vmem:[#allocation2] sm:$0xff] %v463
    %496 = vst [vmem:[#allocation2 + $0x8] sm:$0xff] %v464
    %497 = vst [vmem:[#allocation2 + $0x10] sm:$0xff] %v465
    %498 = vst [vmem:[#allocation2 + $0x18] sm:$0xff] %v466
    %499 = vst [vmem:[#allocation2 + $0x20] sm:$0xff] %v467
    %500 = vst [vmem:[#allocation2 + $0x28] sm:$0xff] %v468
    %501 = vst [vmem:[#allocation2 + $0x30] sm:$0xff] %v469
    %502 = vst [vmem:[#allocation2 + $0x38] sm:$0xff] %v470
    %503 = vst [vmem:[#allocation2 + $0x40] sm:$0xff] %v471
    %504 = vst [vmem:[#allocation2 + $0x48] sm:$0xff] %v472
    %505 = vst [vmem:[#allocation2 + $0x50] sm:$0xff] %v473
    %506 = vst [vmem:[#allocation2 + $0x58] sm:$0xff] %v474
    %507 = vst [vmem:[#allocation2 + $0x60] sm:$0xff] %v475
    %508 = vst [vmem:[#allocation2 + $0x68] sm:$0xff] %v476
    %509 = vst [vmem:[#allocation2 + $0x70] sm:$0xff] %v477
    %510 = vst [vmem:[#allocation2 + $0x78] sm:$0xff] %v478
    %511 = vst [vmem:[#allocation2 + $0x80] sm:$0xff] %v479
    %512 = vst [vmem:[#allocation2 + $0x88] sm:$0xff] %v480
    %513 = vst [vmem:[#allocation2 + $0x90] sm:$0xff] %v481
    %514 = vst [vmem:[#allocation2 + $0x98] sm:$0xff] %v482
    %515 = vst [vmem:[#allocation2 + $0xa0] sm:$0xff] %v483
    %516 = vst [vmem:[#allocation2 + $0xa8] sm:$0xff] %v484
    %517 = vst [vmem:[#allocation2 + $0xb0] sm:$0xff] %v485
    %518 = vst [vmem:[#allocation2 + $0xb8] sm:$0xff] %v486
    %519 = vst [vmem:[#allocation2 + $0xc0] sm:$0xff] %v487
    %520 = vst [vmem:[#allocation2 + $0xc8] sm:$0xff] %v488
    %521 = vst [vmem:[#allocation2 + $0xd0] sm:$0xff] %v489
    %522 = vst [vmem:[#allocation2 + $0xd8] sm:$0xff] %v490
    %523 = vst [vmem:[#allocation2 + $0xe0] sm:$0xff] %v491
    %524 = vst [vmem:[#allocation2 + $0xe8] sm:$0xff] %v492
    %525 = vst [vmem:[#allocation2 + $0xf0] sm:$0xff] %v493
    %526 = vst [vmem:[#allocation2 + $0xf8] sm:$0xff] %v494
    %s527 = smul.u32 0, 4
    %s528 = smul.addr %s527, 8
    %s529 = scalar_lea.vmem [#allocation2], %s528
    %v530 = vld [vmem:[%s529] sm:$0xff]
    %v531 = vld [vmem:[%s529 + $0x8] sm:$0xff]
    %v532 = vld [vmem:[%s529 + $0x10] sm:$0xff]
    %v533 = vld [vmem:[%s529 + $0x18] sm:$0xff]
    %v534 = vld [vmem:[#allocation4] sm:$0xff]
    %v535 = vld [vmem:[#allocation4 + $0x8] sm:$0xff]
    %v536 = vld [vmem:[#allocation4 + $0x10] sm:$0xff]
    %v537 = vld [vmem:[#allocation4 + $0x18] sm:$0xff]
    %v538 = vld [vmem:[#allocation4 + $0x20] sm:$0xff]
    %v539 = vld [vmem:[#allocation4 + $0x28] sm:$0xff]
    %v540 = vld [vmem:[#allocation4 + $0x30] sm:$0xff]
    %v541 = vld [vmem:[#allocation4 + $0x38] sm:$0xff]
    %v542 = vld [vmem:[#allocation4 + $0x40] sm:$0xff]
    %v543 = vld [vmem:[#allocation4 + $0x48] sm:$0xff]
    %v544 = vld [vmem:[#allocation4 + $0x50] sm:$0xff]
    %v545 = vld [vmem:[#allocation4 + $0x58] sm:$0xff]
    %v546 = vld [vmem:[#allocation4 + $0x60] sm:$0xff]
    %v547 = vld [vmem:[#allocation4 + $0x68] sm:$0xff]
    %v548 = vld [vmem:[#allocation4 + $0x70] sm:$0xff]
    %v549 = vld [vmem:[#allocation4 + $0x78] sm:$0xff]
    %v550 = vld [vmem:[#allocation4 + $0x80] sm:$0xff]
    %v551 = vld [vmem:[#allocation4 + $0x88] sm:$0xff]
    %v552 = vld [vmem:[#allocation4 + $0x90] sm:$0xff]
    %v553 = vld [vmem:[#allocation4 + $0x98] sm:$0xff]
    %v554 = vld [vmem:[#allocation4 + $0xa0] sm:$0xff]
    %v555 = vld [vmem:[#allocation4 + $0xa8] sm:$0xff]
    %v556 = vld [vmem:[#allocation4 + $0xb0] sm:$0xff]
    %v557 = vld [vmem:[#allocation4 + $0xb8] sm:$0xff]
    %v558 = vld [vmem:[#allocation4 + $0xc0] sm:$0xff]
    %v559 = vld [vmem:[#allocation4 + $0xc8] sm:$0xff]
    %v560 = vld [vmem:[#allocation4 + $0xd0] sm:$0xff]
    %v561 = vld [vmem:[#allocation4 + $0xd8] sm:$0xff]
    %v562 = vld [vmem:[#allocation4 + $0xe0] sm:$0xff]
    %v563 = vld [vmem:[#allocation4 + $0xe8] sm:$0xff]
    %v564 = vld [vmem:[#allocation4 + $0xf0] sm:$0xff]
    %v565 = vld [vmem:[#allocation4 + $0xf8] sm:$0xff]
    %v598 = vunpack.c.l.b16 %v534
    %v599 = vunpack.c.h.b16 %v534
    %v600 = vunpack.c.l.b16 %v535
    %v601 = vunpack.c.h.b16 %v535
    %v602 = vunpack.c.l.b16 %v536
    %v603 = vunpack.c.h.b16 %v536
    %v604 = vunpack.c.l.b16 %v537
    %v605 = vunpack.c.h.b16 %v537
    %v606 = vunpack.c.l.b16 %v538
    %v607 = vunpack.c.h.b16 %v538
    %v608 = vunpack.c.l.b16 %v539
    %v609 = vunpack.c.h.b16 %v539
    %v610 = vunpack.c.l.b16 %v540
    %v611 = vunpack.c.h.b16 %v540
    %v612 = vunpack.c.l.b16 %v541
    %v613 = vunpack.c.h.b16 %v541
    %v614 = vunpack.c.l.b16 %v542
    %v615 = vunpack.c.h.b16 %v542
    %v616 = vunpack.c.l.b16 %v543
    %v617 = vunpack.c.h.b16 %v543
    %v618 = vunpack.c.l.b16 %v544
    %v619 = vunpack.c.h.b16 %v544
    %v620 = vunpack.c.l.b16 %v545
    %v621 = vunpack.c.h.b16 %v545
    %v622 = vunpack.c.l.b16 %v546
    %v623 = vunpack.c.h.b16 %v546
    %v624 = vunpack.c.l.b16 %v547
    %v625 = vunpack.c.h.b16 %v547
    %v626 = vunpack.c.l.b16 %v548
    %v627 = vunpack.c.h.b16 %v548
    %v628 = vunpack.c.l.b16 %v549
    %v629 = vunpack.c.h.b16 %v549
    %v630 = vunpack.c.l.b16 %v550
    %v631 = vunpack.c.h.b16 %v550
    %v632 = vunpack.c.l.b16 %v551
    %v633 = vunpack.c.h.b16 %v551
    %v634 = vunpack.c.l.b16 %v552
    %v635 = vunpack.c.h.b16 %v552
    %v636 = vunpack.c.l.b16 %v553
    %v637 = vunpack.c.h.b16 %v553
    %v638 = vunpack.c.l.b16 %v554
    %v639 = vunpack.c.h.b16 %v554
    %v640 = vunpack.c.l.b16 %v555
    %v641 = vunpack.c.h.b16 %v555
    %v642 = vunpack.c.l.b16 %v556
    %v643 = vunpack.c.h.b16 %v556
    %v644 = vunpack.c.l.b16 %v557
    %v645 = vunpack.c.h.b16 %v557
    %v646 = vunpack.c.l.b16 %v558
    %v647 = vunpack.c.h.b16 %v558
    %v648 = vunpack.c.l.b16 %v559
    %v649 = vunpack.c.h.b16 %v559
    %v650 = vunpack.c.l.b16 %v560
    %v651 = vunpack.c.h.b16 %v560
    %v652 = vunpack.c.l.b16 %v561
    %v653 = vunpack.c.h.b16 %v561
    %v654 = vunpack.c.l.b16 %v562
    %v655 = vunpack.c.h.b16 %v562
    %v656 = vunpack.c.l.b16 %v563
    %v657 = vunpack.c.h.b16 %v563
    %v658 = vunpack.c.l.b16 %v564
    %v659 = vunpack.c.h.b16 %v564
    %v660 = vunpack.c.l.b16 %v565
    %v661 = vunpack.c.h.b16 %v565
    %v662 = vpack.c.b16 %v602, %v598
    %v663 = vpack.c.b16 %v603, %v599
    %v664 = vpack.c.b16 %v604, %v600
    %v665 = vpack.c.b16 %v605, %v601
    %v666 = vpack.c.b16 %v610, %v606
    %v667 = vpack.c.b16 %v611, %v607
    %v668 = vpack.c.b16 %v612, %v608
    %v669 = vpack.c.b16 %v613, %v609
    %v670 = vpack.c.b16 %v618, %v614
    %v671 = vpack.c.b16 %v619, %v615
    %v672 = vpack.c.b16 %v620, %v616
    %v673 = vpack.c.b16 %v621, %v617
    %v674 = vpack.c.b16 %v626, %v622
    %v675 = vpack.c.b16 %v627, %v623
    %v676 = vpack.c.b16 %v628, %v624
    %v677 = vpack.c.b16 %v629, %v625
    %v678 = vpack.c.b16 %v634, %v630
    %v679 = vpack.c.b16 %v635, %v631
    %v680 = vpack.c.b16 %v636, %v632
    %v681 = vpack.c.b16 %v637, %v633
    %v682 = vpack.c.b16 %v642, %v638
    %v683 = vpack.c.b16 %v643, %v639
    %v684 = vpack.c.b16 %v644, %v640
    %v685 = vpack.c.b16 %v645, %v641
    %v686 = vpack.c.b16 %v650, %v646
    %v687 = vpack.c.b16 %v651, %v647
    %v688 = vpack.c.b16 %v652, %v648
    %v689 = vpack.c.b16 %v653, %v649
    %v690 = vpack.c.b16 %v658, %v654
    %v691 = vpack.c.b16 %v659, %v655
    %v692 = vpack.c.b16 %v660, %v656
    %v693 = vpack.c.b16 %v661, %v657
    %726 = vmatpush.bf16.msra.mxu0 %v690
    %727 = vmatpush.bf16.msra.mxu0 %v686
    %728 = vmatpush.bf16.msra.mxu0 %v682
    %729 = vmatpush.bf16.msra.mxu0 %v678
    %730 = vmatpush.bf16.msra.mxu0 %v674
    %731 = vmatpush.bf16.msra.mxu0 %v670
    %732 = vmatpush.bf16.msra.mxu0 %v666
    %733 = vmatpush.bf16.msra.mxu0 %v662
    %734 = vmatmul.bf16.gmra.mxu0 0
    %v735 = vpop.f32.mrf.mxu0
    %v736 = vadd.f32 0.0, %v735
    %v737 = vpop.f32.mrf.mxu0
    %738 = vdwg.mxu0
    %739 = vmatpush.bf16.msra.mxu0 %v691
    %740 = vmatpush.bf16.msra.mxu0 %v687
    %741 = vmatpush.bf16.msra.mxu0 %v683
    %742 = vmatpush.bf16.msra.mxu0 %v679
    %743 = vmatpush.bf16.msra.mxu0 %v675
    %744 = vmatpush.bf16.msra.mxu0 %v671
    %745 = vmatpush.bf16.msra.mxu0 %v667
    %746 = vmatpush.bf16.msra.mxu0 %v663
    %747 = vmatmul.bf16.gmra.mxu0 0
    %v748 = vpop.f32.mrf.mxu0
    %v749 = vadd.f32 0.0, %v748
    %v750 = vpop.f32.mrf.mxu0
    %751 = vdwg.mxu0
    %752 = vmatpush.bf16.msra.mxu0 %v692
    %753 = vmatpush.bf16.msra.mxu0 %v688
    %754 = vmatpush.bf16.msra.mxu0 %v684
    %755 = vmatpush.bf16.msra.mxu0 %v680
    %756 = vmatpush.bf16.msra.mxu0 %v676
    %757 = vmatpush.bf16.msra.mxu0 %v672
    %758 = vmatpush.bf16.msra.mxu0 %v668
    %759 = vmatpush.bf16.msra.mxu0 %v664
    %760 = vmatmul.bf16.gmra.mxu0 0
    %v761 = vpop.f32.mrf.mxu0
    %v762 = vadd.f32 0.0, %v761
    %v763 = vpop.f32.mrf.mxu0
    %764 = vdwg.mxu0
    %765 = vmatpush.bf16.msra.mxu0 %v693
    %766 = vmatpush.bf16.msra.mxu0 %v689
    %767 = vmatpush.bf16.msra.mxu0 %v685
    %768 = vmatpush.bf16.msra.mxu0 %v681
    %769 = vmatpush.bf16.msra.mxu0 %v677
    %770 = vmatpush.bf16.msra.mxu0 %v673
    %771 = vmatpush.bf16.msra.mxu0 %v669
    %772 = vmatpush.bf16.msra.mxu0 %v665
    %773 = vmatmul.bf16.gmra.mxu0 0
    %v774 = vpop.f32.mrf.mxu0
    %v775 = vadd.f32 0.0, %v774
    %v776 = vpop.f32.mrf.mxu0
    %777 = vdwg.mxu0
    %v778 = vadd.f32 %v530, %v736
    %v779 = vadd.f32 %v531, %v749
    %v780 = vadd.f32 %v532, %v762
    %v781 = vadd.f32 %v533, %v775
    %v782 = vmul.f32 %v778, 0.5
    %v783 = vtanh.pop %v782
    %v784 = vadd.f32 %v783, 1.0
    %v785 = vmul.f32 %v784, 0.5
    %v786 = vmul.f32 %v779, 0.5
    %v787 = vtanh.pop %v786
    %v788 = vadd.f32 %v787, 1.0
    %v789 = vmul.f32 %v788, 0.5
    %v790 = vtanh.pop %v780
    %v791 = vmul.f32 %v781, 0.5
    %v792 = vtanh.pop %v791
    %v793 = vadd.f32 %v792, 1.0
    %v794 = vmul.f32 %v793, 0.5
    %v795 = vmul.f32 %v789, 0.0
    %v796 = vmul.f32 %v785, %v790
    %v797 = vadd.f32 %v795, %v796
    %v798 = vtanh.pop %v797
    %v799 = vmul.f32 %v794, %v798
    %s800 = smul.u32 1, 4
    %s801 = smul.addr %s800, 8
    %s802 = scalar_lea.vmem [#allocation2], %s801
    %v803 = vld [vmem:[%s802] sm:$0xff]
    %v804 = vld [vmem:[%s802 + $0x8] sm:$0xff]
    %v805 = vld [vmem:[%s802 + $0x10] sm:$0xff]
    %v806 = vld [vmem:[%s802 + $0x18] sm:$0xff]
    %v807 = vpack.c.bf16 %v799, %v799
    %808 = vmatpush.bf16.msra.mxu0 %v690
    %809 = vmatpush.bf16.msra.mxu0 %v686
    %810 = vmatpush.bf16.msra.mxu0 %v682
    %811 = vmatpush.bf16.msra.mxu0 %v678
    %812 = vmatpush.bf16.msra.mxu0 %v674
    %813 = vmatpush.bf16.msra.mxu0 %v670
    %814 = vmatpush.bf16.msra.mxu0 %v666
    %815 = vmatpush.bf16.msra.mxu0 %v662
    %816 = vmatmul.bf16.gmra.mxu0 %v807
    %v817 = vpop.f32.mrf.mxu0
    %v818 = vadd.f32 0.0, %v817
    %v819 = vpop.f32.mrf.mxu0
    %820 = vdwg.mxu0
    %821 = vmatpush.bf16.msra.mxu0 %v691
    %822 = vmatpush.bf16.msra.mxu0 %v687
    %823 = vmatpush.bf16.msra.mxu0 %v683
    %824 = vmatpush.bf16.msra.mxu0 %v679
    %825 = vmatpush.bf16.msra.mxu0 %v675
    %826 = vmatpush.bf16.msra.mxu0 %v671
    %827 = vmatpush.bf16.msra.mxu0 %v667
    %828 = vmatpush.bf16.msra.mxu0 %v663
    %829 = vmatmul.bf16.gmra.mxu0 %v807
    %v830 = vpop.f32.mrf.mxu0
    %v831 = vadd.f32 0.0, %v830
    %v832 = vpop.f32.mrf.mxu0
    %833 = vdwg.mxu0
    %834 = vmatpush.bf16.msra.mxu0 %v692
    %835 = vmatpush.bf16.msra.mxu0 %v688
    %836 = vmatpush.bf16.msra.mxu0 %v684
    %837 = vmatpush.bf16.msra.mxu0 %v680
    %838 = vmatpush.bf16.msra.mxu0 %v676
    %839 = vmatpush.bf16.msra.mxu0 %v672
    %840 = vmatpush.bf16.msra.mxu0 %v668
    %841 = vmatpush.bf16.msra.mxu0 %v664
    %842 = vmatmul.bf16.gmra.mxu0 %v807
    %v843 = vpop.f32.mrf.mxu0
    %v844 = vadd.f32 0.0, %v843
    %v845 = vpop.f32.mrf.mxu0
    %846 = vdwg.mxu0
    %847 = vmatpush.bf16.msra.mxu0 %v693
    %848 = vmatpush.bf16.msra.mxu0 %v689
    %849 = vmatpush.bf16.msra.mxu0 %v685
    %850 = vmatpush.bf16.msra.mxu0 %v681
    %851 = vmatpush.bf16.msra.mxu0 %v677
    %852 = vmatpush.bf16.msra.mxu0 %v673
    %853 = vmatpush.bf16.msra.mxu0 %v669
    %854 = vmatpush.bf16.msra.mxu0 %v665
    %855 = vmatmul.bf16.gmra.mxu0 %v807
    %v856 = vpop.f32.mrf.mxu0
    %v857 = vadd.f32 0.0, %v856
    %v858 = vpop.f32.mrf.mxu0
    %859 = vdwg.mxu0
    %v860 = vadd.f32 %v803, %v818
    %v861 = vadd.f32 %v804, %v831
    %v862 = vadd.f32 %v805, %v844
    %v863 = vadd.f32 %v806, %v857
    %v864 = vmul.f32 %v860, 0.5
    %v865 = vtanh.pop %v864
    %v866 = vadd.f32 %v865, 1.0
    %v867 = vmul.f32 %v866, 0.5
    %v868 = vmul.f32 %v861, 0.5
    %v869 = vtanh.pop %v868
    %v870 = vadd.f32 %v869, 1.0
    %v871 = vmul.f32 %v870, 0.5
    %v872 = vtanh.pop %v862
    %v873 = vmul.f32 %v863, 0.5
    %v874 = vtanh.pop %v873
    %v875 = vadd.f32 %v874, 1.0
    %v876 = vmul.f32 %v875, 0.5
    %v877 = vmul.f32 %v871, %v797
    %v878 = vmul.f32 %v867, %v872
    %v879 = vadd.f32 %v877, %v878
    %v880 = vtanh.pop %v879
    %v881 = vmul.f32 %v876, %v880
    %s882 = smul.u32 2, 4
    %s883 = smul.addr %s882, 8
    %s884 = scalar_lea.vmem [#allocation2], %s883
    %v885 = vld [vmem:[%s884] sm:$0xff]
    %v886 = vld [vmem:[%s884 + $0x8] sm:$0xff]
    %v887 = vld [vmem:[%s884 + $0x10] sm:$0xff]
    %v888 = vld [vmem:[%s884 + $0x18] sm:$0xff]
    %v889 = vpack.c.bf16 %v881, %v881
    %890 = vmatpush.bf16.msra.mxu0 %v690
    %891 = vmatpush.bf16.msra.mxu0 %v686
    %892 = vmatpush.bf16.msra.mxu0 %v682
    %893 = vmatpush.bf16.msra.mxu0 %v678
    %894 = vmatpush.bf16.msra.mxu0 %v674
    %895 = vmatpush.bf16.msra.mxu0 %v670
    %896 = vmatpush.bf16.msra.mxu0 %v666
    %897 = vmatpush.bf16.msra.mxu0 %v662
    %898 = vmatmul.bf16.gmra.mxu0 %v889
    %v899 = vpop.f32.mrf.mxu0
    %v900 = vadd.f32 0.0, %v899
    %v901 = vpop.f32.mrf.mxu0
    %902 = vdwg.mxu0
    %903 = vmatpush.bf16.msra.mxu0 %v691
    %904 = vmatpush.bf16.msra.mxu0 %v687
    %905 = vmatpush.bf16.msra.mxu0 %v683
    %906 = vmatpush.bf16.msra.mxu0 %v679
    %907 = vmatpush.bf16.msra.mxu0 %v675
    %908 = vmatpush.bf16.msra.mxu0 %v671
    %909 = vmatpush.bf16.msra.mxu0 %v667
    %910 = vmatpush.bf16.msra.mxu0 %v663
    %911 = vmatmul.bf16.gmra.mxu0 %v889
    %v912 = vpop.f32.mrf.mxu0
    %v913 = vadd.f32 0.0, %v912
    %v914 = vpop.f32.mrf.mxu0
    %915 = vdwg.mxu0
    %916 = vmatpush.bf16.msra.mxu0 %v692
    %917 = vmatpush.bf16.msra.mxu0 %v688
    %918 = vmatpush.bf16.msra.mxu0 %v684
    %919 = vmatpush.bf16.msra.mxu0 %v680
    %920 = vmatpush.bf16.msra.mxu0 %v676
    %921 = vmatpush.bf16.msra.mxu0 %v672
    %922 = vmatpush.bf16.msra.mxu0 %v668
    %923 = vmatpush.bf16.msra.mxu0 %v664
    %924 = vmatmul.bf16.gmra.mxu0 %v889
    %v925 = vpop.f32.mrf.mxu0
    %v926 = vadd.f32 0.0, %v925
    %v927 = vpop.f32.mrf.mxu0
    %928 = vdwg.mxu0
    %929 = vmatpush.bf16.msra.mxu0 %v693
    %930 = vmatpush.bf16.msra.mxu0 %v689
    %931 = vmatpush.bf16.msra.mxu0 %v685
    %932 = vmatpush.bf16.msra.mxu0 %v681
    %933 = vmatpush.bf16.msra.mxu0 %v677
    %934 = vmatpush.bf16.msra.mxu0 %v673
    %935 = vmatpush.bf16.msra.mxu0 %v669
    %936 = vmatpush.bf16.msra.mxu0 %v665
    %937 = vmatmul.bf16.gmra.mxu0 %v889
    %v938 = vpop.f32.mrf.mxu0
    %v939 = vadd.f32 0.0, %v938
    %v940 = vpop.f32.mrf.mxu0
    %941 = vdwg.mxu0
    %v942 = vadd.f32 %v885, %v900
    %v943 = vadd.f32 %v886, %v913
    %v944 = vadd.f32 %v887, %v926
    %v945 = vadd.f32 %v888, %v939
    %v946 = vmul.f32 %v942, 0.5
    %v947 = vtanh.pop %v946
    %v948 = vadd.f32 %v947, 1.0
    %v949 = vmul.f32 %v948, 0.5
    %v950 = vmul.f32 %v943, 0.5
    %v951 = vtanh.pop %v950
    %v952 = vadd.f32 %v951, 1.0
    %v953 = vmul.f32 %v952, 0.5
    %v954 = vtanh.pop %v944
    %v955 = vmul.f32 %v945, 0.5
    %v956 = vtanh.pop %v955
    %v957 = vadd.f32 %v956, 1.0
    %v958 = vmul.f32 %v957, 0.5
    %v959 = vmul.f32 %v953, %v879
    %v960 = vmul.f32 %v949, %v954
    %v961 = vadd.f32 %v959, %v960
    %v962 = vtanh.pop %v961
    %v963 = vmul.f32 %v958, %v962
    %s964 = smul.u32 3, 4
    %s965 = smul.addr %s964, 8
    %s966 = scalar_lea.vmem [#allocation2], %s965
    %v967 = vld [vmem:[%s966] sm:$0xff]
    %v968 = vld [vmem:[%s966 + $0x8] sm:$0xff]
    %v969 = vld [vmem:[%s966 + $0x10] sm:$0xff]
    %v970 = vld [vmem:[%s966 + $0x18] sm:$0xff]
    %v971 = vpack.c.bf16 %v963, %v963
    %972 = vmatpush.bf16.msra.mxu0 %v690
    %973 = vmatpush.bf16.msra.mxu0 %v686
    %974 = vmatpush.bf16.msra.mxu0 %v682
    %975 = vmatpush.bf16.msra.mxu0 %v678
    %976 = vmatpush.bf16.msra.mxu0 %v674
    %977 = vmatpush.bf16.msra.mxu0 %v670
    %978 = vmatpush.bf16.msra.mxu0 %v666
    %979 = vmatpush.bf16.msra.mxu0 %v662
    %980 = vmatmul.bf16.gmra.mxu0 %v971
    %v981 = vpop.f32.mrf.mxu0
    %v982 = vadd.f32 0.0, %v981
    %v983 = vpop.f32.mrf.mxu0
    %984 = vdwg.mxu0
    %985 = vmatpush.bf16.msra.mxu0 %v691
    %986 = vmatpush.bf16.msra.mxu0 %v687
    %987 = vmatpush.bf16.msra.mxu0 %v683
    %988 = vmatpush.bf16.msra.mxu0 %v679
    %989 = vmatpush.bf16.msra.mxu0 %v675
    %990 = vmatpush.bf16.msra.mxu0 %v671
    %991 = vmatpush.bf16.msra.mxu0 %v667
    %992 = vmatpush.bf16.msra.mxu0 %v663
    %993 = vmatmul.bf16.gmra.mxu0 %v971
    %v994 = vpop.f32.mrf.mxu0
    %v995 = vadd.f32 0.0, %v994
    %v996 = vpop.f32.mrf.mxu0
    %997 = vdwg.mxu0
    %998 = vmatpush.bf16.msra.mxu0 %v692
    %999 = vmatpush.bf16.msra.mxu0 %v688
    %1000 = vmatpush.bf16.msra.mxu0 %v684
    %1001 = vmatpush.bf16.msra.mxu0 %v680
    %1002 = vmatpush.bf16.msra.mxu0 %v676
    %1003 = vmatpush.bf16.msra.mxu0 %v672
    %1004 = vmatpush.bf16.msra.mxu0 %v668
    %1005 = vmatpush.bf16.msra.mxu0 %v664
    %1006 = vmatmul.bf16.gmra.mxu0 %v971
    %v1007 = vpop.f32.mrf.mxu0
    %v1008 = vadd.f32 0.0, %v1007
    %v1009 = vpop.f32.mrf.mxu0
    %1010 = vdwg.mxu0
    %1011 = vmatpush.bf16.msra.mxu0 %v693
    %1012 = vmatpush.bf16.msra.mxu0 %v689
    %1013 = vmatpush.bf16.msra.mxu0 %v685
    %1014 = vmatpush.bf16.msra.mxu0 %v681
    %1015 = vmatpush.bf16.msra.mxu0 %v677
    %1016 = vmatpush.bf16.msra.mxu0 %v673
    %1017 = vmatpush.bf16.msra.mxu0 %v669
    %1018 = vmatpush.bf16.msra.mxu0 %v665
    %1019 = vmatmul.bf16.gmra.mxu0 %v971
    %v1020 = vpop.f32.mrf.mxu0
    %v1021 = vadd.f32 0.0, %v1020
    %v1022 = vpop.f32.mrf.mxu0
    %1023 = vdwg.mxu0
    %v1024 = vadd.f32 %v967, %v982
    %v1025 = vadd.f32 %v968, %v995
    %v1026 = vadd.f32 %v969, %v1008
    %v1027 = vadd.f32 %v970, %v1021
    %v1028 = vmul.f32 %v1024, 0.5
    %v1029 = vtanh.pop %v1028
    %v1030 = vadd.f32 %v1029, 1.0
    %v1031 = vmul.f32 %v1030, 0.5
    %v1032 = vmul.f32 %v1025, 0.5
    %v1033 = vtanh.pop %v1032
    %v1034 = vadd.f32 %v1033, 1.0
    %v1035 = vmul.f32 %v1034, 0.5
    %v1036 = vtanh.pop %v1026
    %v1037 = vmul.f32 %v1027, 0.5
    %v1038 = vtanh.pop %v1037
    %v1039 = vadd.f32 %v1038, 1.0
    %v1040 = vmul.f32 %v1039, 0.5
    %v1041 = vmul.f32 %v1035, %v961
    %v1042 = vmul.f32 %v1031, %v1036
    %v1043 = vadd.f32 %v1041, %v1042
    %v1044 = vtanh.pop %v1043
    %v1045 = vmul.f32 %v1040, %v1044
    %s1046 = smul.u32 4, 4
    %s1047 = smul.addr %s1046, 8
    %s1048 = scalar_lea.vmem [#allocation2], %s1047
    %v1049 = vld [vmem:[%s1048] sm:$0xff]
    %v1050 = vld [vmem:[%s1048 + $0x8] sm:$0xff]
    %v1051 = vld [vmem:[%s1048 + $0x10] sm:$0xff]
    %v1052 = vld [vmem:[%s1048 + $0x18] sm:$0xff]
    %v1053 = vpack.c.bf16 %v1045, %v1045
    %1054 = vmatpush.bf16.msra.mxu0 %v690
    %1055 = vmatpush.bf16.msra.mxu0 %v686
    %1056 = vmatpush.bf16.msra.mxu0 %v682
    %1057 = vmatpush.bf16.msra.mxu0 %v678
    %1058 = vmatpush.bf16.msra.mxu0 %v674
    %1059 = vmatpush.bf16.msra.mxu0 %v670
    %1060 = vmatpush.bf16.msra.mxu0 %v666
    %1061 = vmatpush.bf16.msra.mxu0 %v662
    %1062 = vmatmul.bf16.gmra.mxu0 %v1053
    %v1063 = vpop.f32.mrf.mxu0
    %v1064 = vadd.f32 0.0, %v1063
    %v1065 = vpop.f32.mrf.mxu0
    %1066 = vdwg.mxu0
    %1067 = vmatpush.bf16.msra.mxu0 %v691
    %1068 = vmatpush.bf16.msra.mxu0 %v687
    %1069 = vmatpush.bf16.msra.mxu0 %v683
    %1070 = vmatpush.bf16.msra.mxu0 %v679
    %1071 = vmatpush.bf16.msra.mxu0 %v675
    %1072 = vmatpush.bf16.msra.mxu0 %v671
    %1073 = vmatpush.bf16.msra.mxu0 %v667
    %1074 = vmatpush.bf16.msra.mxu0 %v663
    %1075 = vmatmul.bf16.gmra.mxu0 %v1053
    %v1076 = vpop.f32.mrf.mxu0
    %v1077 = vadd.f32 0.0, %v1076
    %v1078 = vpop.f32.mrf.mxu0
    %1079 = vdwg.mxu0
    %1080 = vmatpush.bf16.msra.mxu0 %v692
    %1081 = vmatpush.bf16.msra.mxu0 %v688
    %1082 = vmatpush.bf16.msra.mxu0 %v684
    %1083 = vmatpush.bf16.msra.mxu0 %v680
    %1084 = vmatpush.bf16.msra.mxu0 %v676
    %1085 = vmatpush.bf16.msra.mxu0 %v672
    %1086 = vmatpush.bf16.msra.mxu0 %v668
    %1087 = vmatpush.bf16.msra.mxu0 %v664
    %1088 = vmatmul.bf16.gmra.mxu0 %v1053
    %v1089 = vpop.f32.mrf.mxu0
    %v1090 = vadd.f32 0.0, %v1089
    %v1091 = vpop.f32.mrf.mxu0
    %1092 = vdwg.mxu0
    %1093 = vmatpush.bf16.msra.mxu0 %v693
    %1094 = vmatpush.bf16.msra.mxu0 %v689
    %1095 = vmatpush.bf16.msra.mxu0 %v685
    %1096 = vmatpush.bf16.msra.mxu0 %v681
    %1097 = vmatpush.bf16.msra.mxu0 %v677
    %1098 = vmatpush.bf16.msra.mxu0 %v673
    %1099 = vmatpush.bf16.msra.mxu0 %v669
    %1100 = vmatpush.bf16.msra.mxu0 %v665
    %1101 = vmatmul.bf16.gmra.mxu0 %v1053
    %v1102 = vpop.f32.mrf.mxu0
    %v1103 = vadd.f32 0.0, %v1102
    %v1104 = vpop.f32.mrf.mxu0
    %1105 = vdwg.mxu0
    %v1106 = vadd.f32 %v1049, %v1064
    %v1107 = vadd.f32 %v1050, %v1077
    %v1108 = vadd.f32 %v1051, %v1090
    %v1109 = vadd.f32 %v1052, %v1103
    %v1110 = vmul.f32 %v1106, 0.5
    %v1111 = vtanh.pop %v1110
    %v1112 = vadd.f32 %v1111, 1.0
    %v1113 = vmul.f32 %v1112, 0.5
    %v1114 = vmul.f32 %v1107, 0.5
    %v1115 = vtanh.pop %v1114
    %v1116 = vadd.f32 %v1115, 1.0
    %v1117 = vmul.f32 %v1116, 0.5
    %v1118 = vtanh.pop %v1108
    %v1119 = vmul.f32 %v1109, 0.5
    %v1120 = vtanh.pop %v1119
    %v1121 = vadd.f32 %v1120, 1.0
    %v1122 = vmul.f32 %v1121, 0.5
    %v1123 = vmul.f32 %v1117, %v1043
    %v1124 = vmul.f32 %v1113, %v1118
    %v1125 = vadd.f32 %v1123, %v1124
    %v1126 = vtanh.pop %v1125
    %v1127 = vmul.f32 %v1122, %v1126
    %s1128 = smul.u32 5, 4
    %s1129 = smul.addr %s1128, 8
    %s1130 = scalar_lea.vmem [#allocation2], %s1129
    %v1131 = vld [vmem:[%s1130] sm:$0xff]
    %v1132 = vld [vmem:[%s1130 + $0x8] sm:$0xff]
    %v1133 = vld [vmem:[%s1130 + $0x10] sm:$0xff]
    %v1134 = vld [vmem:[%s1130 + $0x18] sm:$0xff]
    %v1135 = vpack.c.bf16 %v1127, %v1127
    %1136 = vmatpush.bf16.msra.mxu0 %v690
    %1137 = vmatpush.bf16.msra.mxu0 %v686
    %1138 = vmatpush.bf16.msra.mxu0 %v682
    %1139 = vmatpush.bf16.msra.mxu0 %v678
    %1140 = vmatpush.bf16.msra.mxu0 %v674
    %1141 = vmatpush.bf16.msra.mxu0 %v670
    %1142 = vmatpush.bf16.msra.mxu0 %v666
    %1143 = vmatpush.bf16.msra.mxu0 %v662
    %1144 = vmatmul.bf16.gmra.mxu0 %v1135
    %v1145 = vpop.f32.mrf.mxu0
    %v1146 = vadd.f32 0.0, %v1145
    %v1147 = vpop.f32.mrf.mxu0
    %1148 = vdwg.mxu0
    %1149 = vmatpush.bf16.msra.mxu0 %v691
    %1150 = vmatpush.bf16.msra.mxu0 %v687
    %1151 = vmatpush.bf16.msra.mxu0 %v683
    %1152 = vmatpush.bf16.msra.mxu0 %v679
    %1153 = vmatpush.bf16.msra.mxu0 %v675
    %1154 = vmatpush.bf16.msra.mxu0 %v671
    %1155 = vmatpush.bf16.msra.mxu0 %v667
    %1156 = vmatpush.bf16.msra.mxu0 %v663
    %1157 = vmatmul.bf16.gmra.mxu0 %v1135
    %v1158 = vpop.f32.mrf.mxu0
    %v1159 = vadd.f32 0.0, %v1158
    %v1160 = vpop.f32.mrf.mxu0
    %1161 = vdwg.mxu0
    %1162 = vmatpush.bf16.msra.mxu0 %v692
    %1163 = vmatpush.bf16.msra.mxu0 %v688
    %1164 = vmatpush.bf16.msra.mxu0 %v684
    %1165 = vmatpush.bf16.msra.mxu0 %v680
    %1166 = vmatpush.bf16.msra.mxu0 %v676
    %1167 = vmatpush.bf16.msra.mxu0 %v672
    %1168 = vmatpush.bf16.msra.mxu0 %v668
    %1169 = vmatpush.bf16.msra.mxu0 %v664
    %1170 = vmatmul.bf16.gmra.mxu0 %v1135
    %v1171 = vpop.f32.mrf.mxu0
    %v1172 = vadd.f32 0.0, %v1171
    %v1173 = vpop.f32.mrf.mxu0
    %1174 = vdwg.mxu0
    %1175 = vmatpush.bf16.msra.mxu0 %v693
    %1176 = vmatpush.bf16.msra.mxu0 %v689
    %1177 = vmatpush.bf16.msra.mxu0 %v685
    %1178 = vmatpush.bf16.msra.mxu0 %v681
    %1179 = vmatpush.bf16.msra.mxu0 %v677
    %1180 = vmatpush.bf16.msra.mxu0 %v673
    %1181 = vmatpush.bf16.msra.mxu0 %v669
    %1182 = vmatpush.bf16.msra.mxu0 %v665
    %1183 = vmatmul.bf16.gmra.mxu0 %v1135
    %v1184 = vpop.f32.mrf.mxu0
    %v1185 = vadd.f32 0.0, %v1184
    %v1186 = vpop.f32.mrf.mxu0
    %1187 = vdwg.mxu0
    %v1188 = vadd.f32 %v1131, %v1146
    %v1189 = vadd.f32 %v1132, %v1159
    %v1190 = vadd.f32 %v1133, %v1172
    %v1191 = vadd.f32 %v1134, %v1185
    %v1192 = vmul.f32 %v1188, 0.5
    %v1193 = vtanh.pop %v1192
    %v1194 = vadd.f32 %v1193, 1.0
    %v1195 = vmul.f32 %v1194, 0.5
    %v1196 = vmul.f32 %v1189, 0.5
    %v1197 = vtanh.pop %v1196
    %v1198 = vadd.f32 %v1197, 1.0
    %v1199 = vmul.f32 %v1198, 0.5
    %v1200 = vtanh.pop %v1190
    %v1201 = vmul.f32 %v1191, 0.5
    %v1202 = vtanh.pop %v1201
    %v1203 = vadd.f32 %v1202, 1.0
    %v1204 = vmul.f32 %v1203, 0.5
    %v1205 = vmul.f32 %v1199, %v1125
    %v1206 = vmul.f32 %v1195, %v1200
    %v1207 = vadd.f32 %v1205, %v1206
    %v1208 = vtanh.pop %v1207
    %v1209 = vmul.f32 %v1204, %v1208
    %s1210 = smul.u32 6, 4
    %s1211 = smul.addr %s1210, 8
    %s1212 = scalar_lea.vmem [#allocation2], %s1211
    %v1213 = vld [vmem:[%s1212] sm:$0xff]
    %v1214 = vld [vmem:[%s1212 + $0x8] sm:$0xff]
    %v1215 = vld [vmem:[%s1212 + $0x10] sm:$0xff]
    %v1216 = vld [vmem:[%s1212 + $0x18] sm:$0xff]
    %v1217 = vpack.c.bf16 %v1209, %v1209
    %1218 = vmatpush.bf16.msra.mxu0 %v690
    %1219 = vmatpush.bf16.msra.mxu0 %v686
    %1220 = vmatpush.bf16.msra.mxu0 %v682
    %1221 = vmatpush.bf16.msra.mxu0 %v678
    %1222 = vmatpush.bf16.msra.mxu0 %v674
    %1223 = vmatpush.bf16.msra.mxu0 %v670
    %1224 = vmatpush.bf16.msra.mxu0 %v666
    %1225 = vmatpush.bf16.msra.mxu0 %v662
    %1226 = vmatmul.bf16.gmra.mxu0 %v1217
    %v1227 = vpop.f32.mrf.mxu0
    %v1228 = vadd.f32 0.0, %v1227
    %v1229 = vpop.f32.mrf.mxu0
    %1230 = vdwg.mxu0
    %1231 = vmatpush.bf16.msra.mxu0 %v691
    %1232 = vmatpush.bf16.msra.mxu0 %v687
    %1233 = vmatpush.bf16.msra.mxu0 %v683
    %1234 = vmatpush.bf16.msra.mxu0 %v679
    %1235 = vmatpush.bf16.msra.mxu0 %v675
    %1236 = vmatpush.bf16.msra.mxu0 %v671
    %1237 = vmatpush.bf16.msra.mxu0 %v667
    %1238 = vmatpush.bf16.msra.mxu0 %v663
    %1239 = vmatmul.bf16.gmra.mxu0 %v1217
    %v1240 = vpop.f32.mrf.mxu0
    %v1241 = vadd.f32 0.0, %v1240
    %v1242 = vpop.f32.mrf.mxu0
    %1243 = vdwg.mxu0
    %1244 = vmatpush.bf16.msra.mxu0 %v692
    %1245 = vmatpush.bf16.msra.mxu0 %v688
    %1246 = vmatpush.bf16.msra.mxu0 %v684
    %1247 = vmatpush.bf16.msra.mxu0 %v680
    %1248 = vmatpush.bf16.msra.mxu0 %v676
    %1249 = vmatpush.bf16.msra.mxu0 %v672
    %1250 = vmatpush.bf16.msra.mxu0 %v668
    %1251 = vmatpush.bf16.msra.mxu0 %v664
    %1252 = vmatmul.bf16.gmra.mxu0 %v1217
    %v1253 = vpop.f32.mrf.mxu0
    %v1254 = vadd.f32 0.0, %v1253
    %v1255 = vpop.f32.mrf.mxu0
    %1256 = vdwg.mxu0
    %1257 = vmatpush.bf16.msra.mxu0 %v693
    %1258 = vmatpush.bf16.msra.mxu0 %v689
    %1259 = vmatpush.bf16.msra.mxu0 %v685
    %1260 = vmatpush.bf16.msra.mxu0 %v681
    %1261 = vmatpush.bf16.msra.mxu0 %v677
    %1262 = vmatpush.bf16.msra.mxu0 %v673
    %1263 = vmatpush.bf16.msra.mxu0 %v669
    %1264 = vmatpush.bf16.msra.mxu0 %v665
    %1265 = vmatmul.bf16.gmra.mxu0 %v1217
    %v1266 = vpop.f32.mrf.mxu0
    %v1267 = vadd.f32 0.0, %v1266
    %v1268 = vpop.f32.mrf.mxu0
    %1269 = vdwg.mxu0
    %v1270 = vadd.f32 %v1213, %v1228
    %v1271 = vadd.f32 %v1214, %v1241
    %v1272 = vadd.f32 %v1215, %v1254
    %v1273 = vadd.f32 %v1216, %v1267
    %v1274 = vmul.f32 %v1270, 0.5
    %v1275 = vtanh.pop %v1274
    %v1276 = vadd.f32 %v1275, 1.0
    %v1277 = vmul.f32 %v1276, 0.5
    %v1278 = vmul.f32 %v1271, 0.5
    %v1279 = vtanh.pop %v1278
    %v1280 = vadd.f32 %v1279, 1.0
    %v1281 = vmul.f32 %v1280, 0.5
    %v1282 = vtanh.pop %v1272
    %v1283 = vmul.f32 %v1273, 0.5
    %v1284 = vtanh.pop %v1283
    %v1285 = vadd.f32 %v1284, 1.0
    %v1286 = vmul.f32 %v1285, 0.5
    %v1287 = vmul.f32 %v1281, %v1207
    %v1288 = vmul.f32 %v1277, %v1282
    %v1289 = vadd.f32 %v1287, %v1288
    %v1290 = vtanh.pop %v1289
    %v1291 = vmul.f32 %v1286, %v1290
    %s1292 = smul.u32 7, 4
    %s1293 = smul.addr %s1292, 8
    %s1294 = scalar_lea.vmem [#allocation2], %s1293
    %v1295 = vld [vmem:[%s1294] sm:$0xff]
    %v1296 = vld [vmem:[%s1294 + $0x8] sm:$0xff]
    %v1297 = vld [vmem:[%s1294 + $0x10] sm:$0xff]
    %v1298 = vld [vmem:[%s1294 + $0x18] sm:$0xff]
    %v1299 = vpack.c.bf16 %v1291, %v1291
    %1300 = vmatpush.bf16.msra.mxu0 %v690
    %1301 = vmatpush.bf16.msra.mxu0 %v686
    %1302 = vmatpush.bf16.msra.mxu0 %v682
    %1303 = vmatpush.bf16.msra.mxu0 %v678
    %1304 = vmatpush.bf16.msra.mxu0 %v674
    %1305 = vmatpush.bf16.msra.mxu0 %v670
    %1306 = vmatpush.bf16.msra.mxu0 %v666
    %1307 = vmatpush.bf16.msra.mxu0 %v662
    %1308 = vmatmul.bf16.gmra.mxu0 %v1299
    %v1309 = vpop.f32.mrf.mxu0
    %v1310 = vadd.f32 0.0, %v1309
    %v1311 = vpop.f32.mrf.mxu0
    %1312 = vdwg.mxu0
    %1313 = vmatpush.bf16.msra.mxu0 %v691
    %1314 = vmatpush.bf16.msra.mxu0 %v687
    %1315 = vmatpush.bf16.msra.mxu0 %v683
    %1316 = vmatpush.bf16.msra.mxu0 %v679
    %1317 = vmatpush.bf16.msra.mxu0 %v675
    %1318 = vmatpush.bf16.msra.mxu0 %v671
    %1319 = vmatpush.bf16.msra.mxu0 %v667
    %1320 = vmatpush.bf16.msra.mxu0 %v663
    %1321 = vmatmul.bf16.gmra.mxu0 %v1299
    %v1322 = vpop.f32.mrf.mxu0
    %v1323 = vadd.f32 0.0, %v1322
    %v1324 = vpop.f32.mrf.mxu0
    %1325 = vdwg.mxu0
    %1326 = vmatpush.bf16.msra.mxu0 %v692
    %1327 = vmatpush.bf16.msra.mxu0 %v688
    %1328 = vmatpush.bf16.msra.mxu0 %v684
    %1329 = vmatpush.bf16.msra.mxu0 %v680
    %1330 = vmatpush.bf16.msra.mxu0 %v676
    %1331 = vmatpush.bf16.msra.mxu0 %v672
    %1332 = vmatpush.bf16.msra.mxu0 %v668
    %1333 = vmatpush.bf16.msra.mxu0 %v664
    %1334 = vmatmul.bf16.gmra.mxu0 %v1299
    %v1335 = vpop.f32.mrf.mxu0
    %v1336 = vadd.f32 0.0, %v1335
    %v1337 = vpop.f32.mrf.mxu0
    %1338 = vdwg.mxu0
    %1339 = vmatpush.bf16.msra.mxu0 %v693
    %1340 = vmatpush.bf16.msra.mxu0 %v689
    %1341 = vmatpush.bf16.msra.mxu0 %v685
    %1342 = vmatpush.bf16.msra.mxu0 %v681
    %1343 = vmatpush.bf16.msra.mxu0 %v677
    %1344 = vmatpush.bf16.msra.mxu0 %v673
    %1345 = vmatpush.bf16.msra.mxu0 %v669
    %1346 = vmatpush.bf16.msra.mxu0 %v665
    %1347 = vmatmul.bf16.gmra.mxu0 %v1299
    %v1348 = vpop.f32.mrf.mxu0
    %v1349 = vadd.f32 0.0, %v1348
    %v1350 = vpop.f32.mrf.mxu0
    %1351 = vdwg.mxu0
    %v1352 = vadd.f32 %v1295, %v1310
    %v1353 = vadd.f32 %v1296, %v1323
    %v1354 = vadd.f32 %v1297, %v1336
    %v1355 = vadd.f32 %v1298, %v1349
    %v1356 = vmul.f32 %v1352, 0.5
    %v1357 = vtanh.pop %v1356
    %v1358 = vadd.f32 %v1357, 1.0
    %v1359 = vmul.f32 %v1358, 0.5
    %v1360 = vmul.f32 %v1353, 0.5
    %v1361 = vtanh.pop %v1360
    %v1362 = vadd.f32 %v1361, 1.0
    %v1363 = vmul.f32 %v1362, 0.5
    %v1364 = vtanh.pop %v1354
    %v1365 = vmul.f32 %v1355, 0.5
    %v1366 = vtanh.pop %v1365
    %v1367 = vadd.f32 %v1366, 1.0
    %v1368 = vmul.f32 %v1367, 0.5
    %v1369 = vmul.f32 %v1363, %v1289
    %v1370 = vmul.f32 %v1359, %v1364
    %v1371 = vadd.f32 %v1369, %v1370
    %v1372 = vtanh.pop %v1371
    %v1373 = vmul.f32 %v1368, %v1372
    %v1374 = vld [vmem:[%s4] sm:$0x1]
    %v1376 = vperm.slane %v1374, 0
    %v1378 = vmul.f32 %v1373, %v1376
    %1379 = vadd.xlane.f32.xlu0 %v1378
    %v1380 = vpop.xlane.xlu0 %1379
    %v1381 = vld [vmem:[#allocation3] sm:$0x1]
    %v1383 = vperm.slane %v1381, 0
    %v1385 = vadd.f32 %v1380, %v1383
    %vm1386 = vcmask 7168
    %1387 = vst.msk [vmem:[%s6] sm:$0xff] %vm1386, %v1385
    // Predicated region
    $region30: #{lstm_d_forward.1} parent=1 // pred_check
      _
    $region31: #{lstm_d_forward.1} parent=1 // pred_check_branch
      %1389 = sbr.rel (0) target = $region33
    $region32: #{lstm_d_forward.1} parent=1 // pred_region
      _
    $region33: #{lstm_d_forward.1} parent=1 // pred_fallthru
      _
    // Predicated region
    $region34: #{lstm_d_forward.1} parent=1 // pred_check
      _
    $region35: #{lstm_d_forward.1} parent=1 // pred_check_branch
      %1391 = sbr.rel (0) target = $region37
    $region36: #{lstm_d_forward.1} parent=1 // pred_region
      _
    $region37: #{lstm_d_forward.1} parent=1 // pred_fallthru
      _
    %1392 = vsyncpa [#allocation5], 1

</llo_original>
